<compile_context>
chip_gen: v5e
topology: v5e:2x2
jax: 0.10.0
libtpu: 0.0.40
codegen_flags: <defaults>
</compile_context>

<pallas_src>
import jax
import jax.numpy as jnp
from jax import lax
from jax.experimental import pallas as pl
from jax.experimental.pallas import tpu as pltpu

# ----------------------- config (small, consistent with the module) -----------------
BATCH = 2
SEQ = 8
H_SIZE = 32
INTER_SIZE = 64
N_HEADS = 4
HEAD_DIM = H_SIZE // N_HEADS
N_CENTROIDS = 16
TAU1 = 1.0
TAU2 = 0.5
LN_EPS = 1e-5
NEG_BIG = 1e9  # additive mask that disables cross-head attention blocks


# ----------------------- in-kernel helpers ------------------------------------------
def _erf(x):
    # TODO(synk): exact lax.erf is not guaranteed to lower in Mosaic; Abramowitz–Stegun
    # 7.1.26 approximation (|err| < 1.5e-7) matches torch.nn.GELU() to f32 precision.
    a1, a2, a3, a4, a5 = 0.254829592, -0.284496736, 1.421413741, -1.453152027, 1.061405429
    p = 0.3275911
    ax = jnp.abs(x)
    t = 1.0 / (1.0 + p * ax)
    poly = ((((a5 * t + a4) * t + a3) * t + a2) * t + a1) * t
    y = 1.0 - poly * jnp.exp(-ax * ax)
    return jnp.where(x >= 0, y, -y)


def _gelu(x):
    return 0.5 * x * (1.0 + _erf(x * 0.7071067811865476))


def _hard_onehot(logits):
    # Forward value of F.gumbel_softmax(..., hard=True): one-hot of the row argmax
    # (noise already added). With continuous Gumbel noise ties are measure-zero, so the
    # iota/min tie-break of the previous version is dropped (saves an XLU reduction).
    m = jnp.max(logits, axis=-1, keepdims=True)
    return (logits >= m).astype(logits.dtype)


def _layer_norm(x, w, b):
    mean = jnp.mean(x, axis=-1, keepdims=True)
    var = jnp.mean(jnp.square(x - mean), axis=-1, keepdims=True)
    return (x - mean) * lax.rsqrt(var + LN_EPS) * w + b


# ----------------------- kernel ------------------------------------------------------
def layer_kernel(x_ref, mask_ref, gk_ref, ga_ref,
                 wqkv_ref, bqkv_ref, cen_ref,
                 wo_ref, bo_ref, ln1w_ref, ln1b_ref,
                 wi_ref, bi_ref, wf_ref, bf_ref, ln2w_ref, ln2b_ref,
                 out_ref):
    D = HEAD_DIM
    x = x_ref[0]                    # (S, H)
    mask_hm = mask_ref[0]           # (NH*S, 1) : row (h, s) -> mask[s]
    cen = cen_ref[...]              # (D, C)

    # --- fused QKV projection; weight columns ordered head-major: (head, {q,k,v}, d) ---
    qkv = jnp.dot(x, wqkv_ref[...], preferred_element_type=jnp.float32) + bqkv_ref[...]  # (S, NH*3D)

    # heads -> sublane axis: (NH*S, 3D) with row order (head, seq)
    qkv_hm = jnp.concatenate(
        [qkv[:, h * 3 * D:(h + 1) * 3 * D] for h in range(N_HEADS)], axis=0)
    q_hm = qkv_hm[:, 0:D]                                  # (NH*S, D)
    k_hm = qkv_hm[:, D:2 * D]                              # (NH*S, D)
    v_hm = qkv_hm[:, 2 * D:3 * D] * mask_hm                # key-side mask folded into V

    # --- stochastic key quantization: all heads in one shot (shared centroid) ---
    k_logits = (jnp.dot(k_hm, cen, preferred_element_type=jnp.float32) + gk_ref[0]) / TAU1
    k_onehot = _hard_onehot(k_logits)                      # (NH*S, C)
    sto_k = lax.dot_general(k_onehot, cen, (((1,), (1,)), ((), ())),
                            preferred_element_type=jnp.float32)      # (NH*S, D)

    # --- hard-Gumbel attention: one wide matmul; cross-head blocks carry -1e9 in ga ---
    interact = lax.dot_general(q_hm, sto_k, (((1,), (1,)), ((), ())),
                               preferred_element_type=jnp.float32)   # (NH*S, NH*S)
    a_logits = (interact + ga_ref[0]) / TAU2
    attn = _hard_onehot(a_logits)                          # (NH*S, NH*S), block-diag one-hots
    head_out = jnp.dot(attn, v_hm,
                       preferred_element_type=jnp.float32) * mask_hm  # query-side mask

    # --- per-head output-projection accumulation (replaces lane concat + single Wo dot) ---
    wo = wo_ref[...]                                       # (NH, D, H)
    acc = jnp.dot(head_out[0:SEQ, :], wo[0], preferred_element_type=jnp.float32)
    for h in range(1, N_HEADS):
        acc = acc + jnp.dot(head_out[h * SEQ:(h + 1) * SEQ, :], wo[h],
                            preferred_element_type=jnp.float32)

    attn_out = _layer_norm(acc + bo_ref[...] + x, ln1w_ref[...], ln1b_ref[...])

    inter = _gelu(jnp.dot(attn_out, wi_ref[...],
                          preferred_element_type=jnp.float32) + bi_ref[...])     # (S, INTER)
    ffn = jnp.dot(inter, wf_ref[...], preferred_element_type=jnp.float32) + bf_ref[...]
    out_ref[0] = _layer_norm(ffn + attn_out, ln2w_ref[...], ln2b_ref[...])


# ----------------------- wrapper -----------------------------------------------------
def run_layer(x, mask_hm, gk_hm, ga_aug, params):
    B, S, H = x.shape
    HM = N_HEADS * S

    def full(shape):
        n = len(shape)
        return pl.BlockSpec(shape, lambda b, _n=n: (0,) * _n)

    in_specs = [
        pl.BlockSpec((1, S, H), lambda b: (b, 0, 0)),                 # x
        pl.BlockSpec((1, HM, 1), lambda b: (b, 0, 0)),                # head-major mask
        pl.BlockSpec((1, HM, N_CENTROIDS), lambda b: (b, 0, 0)),      # gumbel (key quant)
        pl.BlockSpec((1, HM, HM), lambda b: (b, 0, 0)),               # gumbel+blockmask (attn)
        full((H, 3 * H)), full((1, 3 * H)),                           # fused qkv weight/bias
        full((HEAD_DIM, N_CENTROIDS)),                                # centroid
        full((N_HEADS, HEAD_DIM, H)), full((1, H)),                   # wo (per-head), bo
        full((1, H)), full((1, H)),                                   # ln1 w, b
        full((H, INTER_SIZE)), full((1, INTER_SIZE)),                 # wi, bi
        full((INTER_SIZE, H)), full((1, H)),                          # wf, bf
        full((1, H)), full((1, H)),                                   # ln2 w, b
    ]

    return pl.pallas_call(
        layer_kernel,
        out_shape=jax.ShapeDtypeStruct((B, S, H), jnp.float32),
        grid=(B,),
        in_specs=in_specs,
        out_specs=pl.BlockSpec((1, S, H), lambda b: (b, 0, 0)),
        compiler_params=pltpu.CompilerParams(dimension_semantics=("parallel",)),
    )(x, mask_hm, gk_hm, ga_aug,
      params["wqkv"], params["bqkv"], params["centroid"],
      params["wo_r"], params["bo"], params["ln1_w"], params["ln1_b"],
      params["wi"], params["bi"], params["wf"], params["bf"],
      params["ln2_w"], params["ln2_b"])


# ----------------------- pure-JAX reference (same math, host side) -------------------
def reference_layer(x, mask, gk, ga, p):
    B, S, H = x.shape
    D = HEAD_DIM
    # same fused/permuted projection arithmetic as the kernel (column order (h, {q,k,v}, d))
    qkv = x @ p["wqkv"] + p["bqkv"]                                   # (B, S, NH*3D)
    qkv = qkv.reshape(B, S, N_HEADS, 3 * D).transpose(0, 2, 1, 3)     # (B, NH, S, 3D)
    qh, kh, vh = qkv[..., :D], qkv[..., D:2 * D], qkv[..., 2 * D:]
    cen = p["centroid"]
    k_logits = (jnp.einsum("bhsd,dc->bhsc", kh, cen) + gk) / TAU1
    k_onehot = _hard_onehot(k_logits)
    sto_k = jnp.einsum("bhsc,dc->bhsd", k_onehot, cen)
    interact = jnp.einsum("bhqd,bhkd->bhqk", qh, sto_k)
    a_onehot = _hard_onehot((interact + ga) / TAU2)
    maskmat = mask[:, None, :, None] * mask[:, None, None, :]
    attn = a_onehot * maskmat
    out = jnp.einsum("bhqk,bhkd->bhqd", attn, vh)
    out = out.transpose(0, 2, 1, 3).reshape(B, S, H)
    attn_out = out @ p["wo"] + p["bo"]
    attn_out = _layer_norm(attn_out + x, p["ln1_w"], p["ln1_b"])
    inter = _gelu(attn_out @ p["wi"] + p["bi"])
    ffn = inter @ p["wf"] + p["bf"]
    return _layer_norm(ffn + attn_out, p["ln2_w"], p["ln2_b"])


# ----------------------- main --------------------------------------------------------
if __name__ == "__main__":
    key = jax.random.PRNGKey(0)
    keys = jax.random.split(key, 16)
    D, NH, S, C = HEAD_DIM, N_HEADS, SEQ, N_CENTROIDS

    def lin(k, fan_in, fan_out):
        bound = 1.0 / jnp.sqrt(fan_in)
        kw, kb = jax.random.split(k)
        w = jax.random.uniform(kw, (fan_in, fan_out), jnp.float32, -bound, bound)
        b = jax.random.uniform(kb, (1, fan_out), jnp.float32, -bound, bound)
        return w, b

    wq, bq = lin(keys[0], H_SIZE, H_SIZE)
    wk, bk = lin(keys[1], H_SIZE, H_SIZE)
    wv, bv = lin(keys[2], H_SIZE, H_SIZE)
    wo, bo = lin(keys[3], H_SIZE, H_SIZE)
    wi, bi = lin(keys[4], H_SIZE, INTER_SIZE)
    wf, bf = lin(keys[5], INTER_SIZE, H_SIZE)
    centroid = jax.random.uniform(keys[6], (D, C), jnp.float32, -0.5, 0.5)

    # fused, head-major-permuted QKV weight/bias (columns ordered (head, {q,k,v}, d))
    wqkv = jnp.concatenate(
        [jnp.concatenate([wq[:, h * D:(h + 1) * D],
                          wk[:, h * D:(h + 1) * D],
                          wv[:, h * D:(h + 1) * D]], axis=1) for h in range(NH)], axis=1)
    bqkv = jnp.concatenate(
        [jnp.concatenate([bq[:, h * D:(h + 1) * D],
                          bk[:, h * D:(h + 1) * D],
                          bv[:, h * D:(h + 1) * D]], axis=1) for h in range(NH)], axis=1)
    wo_r = wo.reshape(NH, D, H_SIZE)   # rows h*D+d of wo -> wo_r[h, d, :]

    params = dict(
        wqkv=wqkv, bqkv=bqkv, centroid=centroid,
        wo=wo, wo_r=wo_r, bo=bo,
        ln1_w=jnp.ones((1, H_SIZE), jnp.float32), ln1_b=jnp.zeros((1, H_SIZE), jnp.float32),
        wi=wi, bi=bi, wf=wf, bf=bf,
        ln2_w=jnp.ones((1, H_SIZE), jnp.float32), ln2_b=jnp.zeros((1, H_SIZE), jnp.float32),
    )

    x = jax.random.normal(keys[7], (BATCH, S, H_SIZE), jnp.float32)
    lengths = jnp.array([S, S - 3], jnp.int32)
    mask = (jnp.arange(S)[None, :] < lengths[:, None]).astype(jnp.float32)   # (B, S)

    # deterministic Gumbel noise (F.gumbel_softmax draws fresh noise; identity-dropout eval mode)
    gk = jax.random.gumbel(keys[8], (BATCH, NH, S, C), jnp.float32)
    ga = jax.random.gumbel(keys[9], (BATCH, NH, S, S), jnp.float32)

    # host-side repacking into the kernel's head-major layout
    mask_hm = jnp.tile(mask, (1, NH))[:, :, None]                     # (B, NH*S, 1)
    gk_hm = gk.reshape(BATCH, NH * S, C)                              # (B, NH*S, C)
    ga_aug = jnp.zeros((BATCH, NH * S, NH * S), jnp.float32)
    for h in range(NH):
        ga_aug = ga_aug.at[:, h * S:(h + 1) * S, h * S:(h + 1) * S].set(ga[:, h])
    blk = jnp.kron(jnp.eye(NH, dtype=jnp.float32), jnp.ones((S, S), jnp.float32))
    ga_aug = ga_aug + (blk - 1.0)[None] * NEG_BIG                     # -1e9 off-head blocks

    out = run_layer(x, mask_hm, gk_hm, ga_aug, params)
    out = jax.block_until_ready(out)

    ref = reference_layer(x, mask, gk, ga, params)
    assert out.shape == (BATCH, S, H_SIZE)
    assert bool(jnp.all(jnp.isfinite(out)))
    assert bool(jnp.allclose(out, ref, rtol=5e-3, atol=5e-3))
    print("KERNEL_OK")
</pallas_src>

<mosaic_0001>
module attributes {stable_mosaic.version = 11 : i64} {
  func.func @layer_kernel(%arg0: i32, %arg1: memref<1x8x32xf32, #tpu.memory_space<vmem>>, %arg2: memref<1x32x1xf32, #tpu.memory_space<vmem>>, %arg3: memref<1x32x16xf32, #tpu.memory_space<vmem>>, %arg4: memref<1x32x32xf32, #tpu.memory_space<vmem>>, %arg5: memref<32x96xf32, #tpu.memory_space<vmem>>, %arg6: memref<1x96xf32, #tpu.memory_space<vmem>>, %arg7: memref<8x16xf32, #tpu.memory_space<vmem>>, %arg8: memref<4x8x32xf32, #tpu.memory_space<vmem>>, %arg9: memref<1x32xf32, #tpu.memory_space<vmem>>, %arg10: memref<1x32xf32, #tpu.memory_space<vmem>>, %arg11: memref<1x32xf32, #tpu.memory_space<vmem>>, %arg12: memref<32x64xf32, #tpu.memory_space<vmem>>, %arg13: memref<1x64xf32, #tpu.memory_space<vmem>>, %arg14: memref<64x32xf32, #tpu.memory_space<vmem>>, %arg15: memref<1x32xf32, #tpu.memory_space<vmem>>, %arg16: memref<1x32xf32, #tpu.memory_space<vmem>>, %arg17: memref<1x32xf32, #tpu.memory_space<vmem>>, %arg18: memref<1x8x32xf32, #tpu.memory_space<vmem>>) attributes {dimension_semantics = [#tpu.dimension_semantics<parallel>], iteration_bounds = array<i64: 2>, scalar_prefetch = 0 : i64, scratch_operands = 0 : i64, tpu.core_type = #tpu.core_type<tc>, window_params = [{transform_indices = @transform_0, window_bounds = array<i64: 1, 8, 32>}, {transform_indices = @transform_1, window_bounds = array<i64: 1, 32, 1>}, {transform_indices = @transform_2, window_bounds = array<i64: 1, 32, 16>}, {transform_indices = @transform_3, window_bounds = array<i64: 1, 32, 32>}, {pipeline_mode = #tpu.pipeline_mode<synchronous>, transform_indices = @transform_4, window_bounds = array<i64: 32, 96>}, {pipeline_mode = #tpu.pipeline_mode<synchronous>, transform_indices = @transform_5, window_bounds = array<i64: 1, 96>}, {pipeline_mode = #tpu.pipeline_mode<synchronous>, transform_indices = @transform_6, window_bounds = array<i64: 8, 16>}, {pipeline_mode = #tpu.pipeline_mode<synchronous>, transform_indices = @transform_7, window_bounds = array<i64: 4, 8, 32>}, {pipeline_mode = #tpu.pipeline_mode<synchronous>, transform_indices = @transform_8, window_bounds = array<i64: 1, 32>}, {pipeline_mode = #tpu.pipeline_mode<synchronous>, transform_indices = @transform_9, window_bounds = array<i64: 1, 32>}, {pipeline_mode = #tpu.pipeline_mode<synchronous>, transform_indices = @transform_10, window_bounds = array<i64: 1, 32>}, {pipeline_mode = #tpu.pipeline_mode<synchronous>, transform_indices = @transform_11, window_bounds = array<i64: 32, 64>}, {pipeline_mode = #tpu.pipeline_mode<synchronous>, transform_indices = @transform_12, window_bounds = array<i64: 1, 64>}, {pipeline_mode = #tpu.pipeline_mode<synchronous>, transform_indices = @transform_13, window_bounds = array<i64: 64, 32>}, {pipeline_mode = #tpu.pipeline_mode<synchronous>, transform_indices = @transform_14, window_bounds = array<i64: 1, 32>}, {pipeline_mode = #tpu.pipeline_mode<synchronous>, transform_indices = @transform_15, window_bounds = array<i64: 1, 32>}, {pipeline_mode = #tpu.pipeline_mode<synchronous>, transform_indices = @transform_16, window_bounds = array<i64: 1, 32>}, {transform_indices = @transform_17, window_bounds = array<i64: 1, 8, 32>}]} {
    %c0 = arith.constant 0 : index
    %c0_0 = arith.constant 0 : index
    %c0_1 = arith.constant 0 : index
    %0 = vector.load %arg1[%c0, %c0_0, %c0_1] : memref<1x8x32xf32, #tpu.memory_space<vmem>>, vector<1x8x32xf32>
    %1 = vector.shape_cast %0 : vector<1x8x32xf32> to vector<8x32xf32>
    %c0_2 = arith.constant 0 : index
    %c0_3 = arith.constant 0 : index
    %c0_4 = arith.constant 0 : index
    %2 = vector.load %arg2[%c0_2, %c0_3, %c0_4] : memref<1x32x1xf32, #tpu.memory_space<vmem>>, vector<1x32x1xf32>
    %3 = vector.shape_cast %2 : vector<1x32x1xf32> to vector<32x1xf32>
    %c0_5 = arith.constant 0 : index
    %c0_6 = arith.constant 0 : index
    %4 = vector.load %arg7[%c0_5, %c0_6] : memref<8x16xf32, #tpu.memory_space<vmem>>, vector<8x16xf32>
    %c0_7 = arith.constant 0 : index
    %c0_8 = arith.constant 0 : index
    %5 = vector.load %arg5[%c0_7, %c0_8] : memref<32x96xf32, #tpu.memory_space<vmem>>, vector<32x96xf32>
    %cst = arith.constant dense<0.000000e+00> : vector<8x96xf32>
    %6 = tpu.matmul %1, %5, %cst {dimension_numbers = #tpu.dot_dimension_numbers<[1], [0], [0], [1], [0, 0, 1, 1], [], []>} : vector<8x32xf32>, vector<32x96xf32>, vector<8x96xf32> -> vector<8x96xf32>
    %c0_9 = arith.constant 0 : index
    %c0_10 = arith.constant 0 : index
    %7 = vector.load %arg6[%c0_9, %c0_10] : memref<1x96xf32, #tpu.memory_space<vmem>>, vector<1x96xf32>
    %8 = vector.broadcast %7 : vector<1x96xf32> to vector<8x96xf32>
    %9 = arith.addf %6, %8 : vector<8x96xf32>
    %10 = vector.extract_strided_slice %9 {offsets = [0, 0], sizes = [8, 24], strides = [1, 1]} : vector<8x96xf32> to vector<8x24xf32>
    %11 = vector.extract_strided_slice %9 {offsets = [0, 24], sizes = [8, 24], strides = [1, 1]} : vector<8x96xf32> to vector<8x24xf32>
    %12 = vector.extract_strided_slice %9 {offsets = [0, 48], sizes = [8, 24], strides = [1, 1]} : vector<8x96xf32> to vector<8x24xf32>
    %13 = vector.extract_strided_slice %9 {offsets = [0, 72], sizes = [8, 24], strides = [1, 1]} : vector<8x96xf32> to vector<8x24xf32>
    %14 = tpu.concatenate %10, %11, %12, %13 in 0 : vector<8x24xf32>, vector<8x24xf32>, vector<8x24xf32>, vector<8x24xf32> -> vector<32x24xf32>
    %15 = vector.extract_strided_slice %14 {offsets = [0, 0], sizes = [32, 8], strides = [1, 1]} : vector<32x24xf32> to vector<32x8xf32>
    %16 = vector.extract_strided_slice %14 {offsets = [0, 8], sizes = [32, 8], strides = [1, 1]} : vector<32x24xf32> to vector<32x8xf32>
    %17 = vector.extract_strided_slice %14 {offsets = [0, 16], sizes = [32, 8], strides = [1, 1]} : vector<32x24xf32> to vector<32x8xf32>
    %18 = vector.broadcast %3 : vector<32x1xf32> to vector<32x8xf32>
    %19 = arith.mulf %17, %18 : vector<32x8xf32>
    %cst_11 = arith.constant dense<0.000000e+00> : vector<32x16xf32>
    %20 = tpu.matmul %16, %4, %cst_11 {dimension_numbers = #tpu.dot_dimension_numbers<[1], [0], [0], [1], [0, 0, 1, 1], [], []>} : vector<32x8xf32>, vector<8x16xf32>, vector<32x16xf32> -> vector<32x16xf32>
    %c0_12 = arith.constant 0 : index
    %c0_13 = arith.constant 0 : index
    %c0_14 = arith.constant 0 : index
    %21 = vector.load %arg3[%c0_12, %c0_13, %c0_14] : memref<1x32x16xf32, #tpu.memory_space<vmem>>, vector<1x32x16xf32>
    %22 = vector.shape_cast %21 : vector<1x32x16xf32> to vector<32x16xf32>
    %23 = arith.addf %20, %22 : vector<32x16xf32>
    %cst_15 = arith.constant 1.000000e+00 : f32
    %24 = vector.broadcast %cst_15 : f32 to vector<32x16xf32>
    %25 = arith.divf %23, %24 : vector<32x16xf32>
    %cst_16 = arith.constant dense<0xFF800000> : vector<32xf32>
    %26 = vector.multi_reduction <maximumf>, %25, %cst_16 [1] : vector<32x16xf32> to vector<32xf32>
    %27 = vector.shape_cast %26 : vector<32xf32> to vector<32x1xf32>
    %28 = vector.broadcast %27 : vector<32x1xf32> to vector<32x16xf32>
    %29 = arith.cmpf oge, %25, %28 : vector<32x16xf32>
    %30 = arith.extui %29 : vector<32x16xi1> to vector<32x16xi32>
    %31 = arith.sitofp %30 : vector<32x16xi32> to vector<32x16xf32>
    %cst_17 = arith.constant dense<0.000000e+00> : vector<32x8xf32>
    %32 = tpu.matmul %31, %4, %cst_17 {dimension_numbers = #tpu.dot_dimension_numbers<[1], [1], [0], [0], [0, 0, 1, 0], [], []>} : vector<32x16xf32>, vector<8x16xf32>, vector<32x8xf32> -> vector<32x8xf32>
    %cst_18 = arith.constant dense<0.000000e+00> : vector<32x32xf32>
    %33 = tpu.matmul %15, %32, %cst_18 {dimension_numbers = #tpu.dot_dimension_numbers<[1], [1], [0], [0], [0, 0, 1, 0], [], []>} : vector<32x8xf32>, vector<32x8xf32>, vector<32x32xf32> -> vector<32x32xf32>
    %c0_19 = arith.constant 0 : index
    %c0_20 = arith.constant 0 : index
    %c0_21 = arith.constant 0 : index
    %34 = vector.load %arg4[%c0_19, %c0_20, %c0_21] : memref<1x32x32xf32, #tpu.memory_space<vmem>>, vector<1x32x32xf32>
    %35 = vector.shape_cast %34 : vector<1x32x32xf32> to vector<32x32xf32>
    %36 = arith.addf %33, %35 : vector<32x32xf32>
    %cst_22 = arith.constant 5.000000e-01 : f32
    %37 = vector.broadcast %cst_22 : f32 to vector<32x32xf32>
    %38 = arith.divf %36, %37 : vector<32x32xf32>
    %cst_23 = arith.constant dense<0xFF800000> : vector<32xf32>
    %39 = vector.multi_reduction <maximumf>, %38, %cst_23 [1] : vector<32x32xf32> to vector<32xf32>
    %40 = vector.shape_cast %39 : vector<32xf32> to vector<32x1xf32>
    %41 = vector.broadcast %40 : vector<32x1xf32> to vector<32x32xf32>
    %42 = arith.cmpf oge, %38, %41 : vector<32x32xf32>
    %43 = arith.extui %42 : vector<32x32xi1> to vector<32x32xi32>
    %44 = arith.sitofp %43 : vector<32x32xi32> to vector<32x32xf32>
    %cst_24 = arith.constant dense<0.000000e+00> : vector<32x8xf32>
    %45 = tpu.matmul %44, %19, %cst_24 {dimension_numbers = #tpu.dot_dimension_numbers<[1], [0], [0], [1], [0, 0, 1, 1], [], []>} : vector<32x32xf32>, vector<32x8xf32>, vector<32x8xf32> -> vector<32x8xf32>
    %46 = vector.broadcast %3 : vector<32x1xf32> to vector<32x8xf32>
    %47 = arith.mulf %45, %46 : vector<32x8xf32>
    %c0_25 = arith.constant 0 : index
    %c0_26 = arith.constant 0 : index
    %c0_27 = arith.constant 0 : index
    %48 = vector.load %arg8[%c0_25, %c0_26, %c0_27] : memref<4x8x32xf32, #tpu.memory_space<vmem>>, vector<4x8x32xf32>
    %49 = vector.extract_strided_slice %47 {offsets = [0, 0], sizes = [8, 8], strides = [1, 1]} : vector<32x8xf32> to vector<8x8xf32>
    %50 = vector.extract_strided_slice %48 {offsets = [0, 0, 0], sizes = [1, 8, 32], strides = [1, 1, 1]} : vector<4x8x32xf32> to vector<1x8x32xf32>
    %51 = vector.shape_cast %50 : vector<1x8x32xf32> to vector<8x32xf32>
    %cst_28 = arith.constant dense<0.000000e+00> : vector<8x32xf32>
    %52 = tpu.matmul %49, %51, %cst_28 {dimension_numbers = #tpu.dot_dimension_numbers<[1], [0], [0], [1], [0, 0, 1, 1], [], []>} : vector<8x8xf32>, vector<8x32xf32>, vector<8x32xf32> -> vector<8x32xf32>
    %53 = vector.extract_strided_slice %47 {offsets = [8, 0], sizes = [8, 8], strides = [1, 1]} : vector<32x8xf32> to vector<8x8xf32>
    %54 = vector.extract_strided_slice %48 {offsets = [1, 0, 0], sizes = [1, 8, 32], strides = [1, 1, 1]} : vector<4x8x32xf32> to vector<1x8x32xf32>
    %55 = vector.shape_cast %54 : vector<1x8x32xf32> to vector<8x32xf32>
    %cst_29 = arith.constant dense<0.000000e+00> : vector<8x32xf32>
    %56 = tpu.matmul %53, %55, %cst_29 {dimension_numbers = #tpu.dot_dimension_numbers<[1], [0], [0], [1], [0, 0, 1, 1], [], []>} : vector<8x8xf32>, vector<8x32xf32>, vector<8x32xf32> -> vector<8x32xf32>
    %57 = arith.addf %52, %56 : vector<8x32xf32>
    %58 = vector.extract_strided_slice %47 {offsets = [16, 0], sizes = [8, 8], strides = [1, 1]} : vector<32x8xf32> to vector<8x8xf32>
    %59 = vector.extract_strided_slice %48 {offsets = [2, 0, 0], sizes = [1, 8, 32], strides = [1, 1, 1]} : vector<4x8x32xf32> to vector<1x8x32xf32>
    %60 = vector.shape_cast %59 : vector<1x8x32xf32> to vector<8x32xf32>
    %cst_30 = arith.constant dense<0.000000e+00> : vector<8x32xf32>
    %61 = tpu.matmul %58, %60, %cst_30 {dimension_numbers = #tpu.dot_dimension_numbers<[1], [0], [0], [1], [0, 0, 1, 1], [], []>} : vector<8x8xf32>, vector<8x32xf32>, vector<8x32xf32> -> vector<8x32xf32>
    %62 = arith.addf %57, %61 : vector<8x32xf32>
    %63 = vector.extract_strided_slice %47 {offsets = [24, 0], sizes = [8, 8], strides = [1, 1]} : vector<32x8xf32> to vector<8x8xf32>
    %64 = vector.extract_strided_slice %48 {offsets = [3, 0, 0], sizes = [1, 8, 32], strides = [1, 1, 1]} : vector<4x8x32xf32> to vector<1x8x32xf32>
    %65 = vector.shape_cast %64 : vector<1x8x32xf32> to vector<8x32xf32>
    %cst_31 = arith.constant dense<0.000000e+00> : vector<8x32xf32>
    %66 = tpu.matmul %63, %65, %cst_31 {dimension_numbers = #tpu.dot_dimension_numbers<[1], [0], [0], [1], [0, 0, 1, 1], [], []>} : vector<8x8xf32>, vector<8x32xf32>, vector<8x32xf32> -> vector<8x32xf32>
    %67 = arith.addf %62, %66 : vector<8x32xf32>
    %c0_32 = arith.constant 0 : index
    %c0_33 = arith.constant 0 : index
    %68 = vector.load %arg9[%c0_32, %c0_33] : memref<1x32xf32, #tpu.memory_space<vmem>>, vector<1x32xf32>
    %69 = vector.broadcast %68 : vector<1x32xf32> to vector<8x32xf32>
    %70 = arith.addf %67, %69 : vector<8x32xf32>
    %71 = arith.addf %70, %1 : vector<8x32xf32>
    %c0_34 = arith.constant 0 : index
    %c0_35 = arith.constant 0 : index
    %72 = vector.load %arg10[%c0_34, %c0_35] : memref<1x32xf32, #tpu.memory_space<vmem>>, vector<1x32xf32>
    %c0_36 = arith.constant 0 : index
    %c0_37 = arith.constant 0 : index
    %73 = vector.load %arg11[%c0_36, %c0_37] : memref<1x32xf32, #tpu.memory_space<vmem>>, vector<1x32xf32>
    %cst_38 = arith.constant dense<0.000000e+00> : vector<8xf32>
    %74 = vector.multi_reduction <add>, %71, %cst_38 [1] : vector<8x32xf32> to vector<8xf32>
    %75 = vector.shape_cast %74 : vector<8xf32> to vector<8x1xf32>
    %cst_39 = arith.constant 3.200000e+01 : f32
    %76 = vector.broadcast %cst_39 : f32 to vector<8x1xf32>
    %77 = arith.divf %75, %76 : vector<8x1xf32>
    %78 = vector.broadcast %77 : vector<8x1xf32> to vector<8x32xf32>
    %79 = arith.subf %71, %78 : vector<8x32xf32>
    %80 = arith.mulf %79, %79 : vector<8x32xf32>
    %cst_40 = arith.constant dense<0.000000e+00> : vector<8xf32>
    %81 = vector.multi_reduction <add>, %80, %cst_40 [1] : vector<8x32xf32> to vector<8xf32>
    %82 = vector.shape_cast %81 : vector<8xf32> to vector<8x1xf32>
    %cst_41 = arith.constant 3.200000e+01 : f32
    %83 = vector.broadcast %cst_41 : f32 to vector<8x1xf32>
    %84 = arith.divf %82, %83 : vector<8x1xf32>
    %85 = vector.broadcast %77 : vector<8x1xf32> to vector<8x32xf32>
    %86 = arith.subf %71, %85 : vector<8x32xf32>
    %cst_42 = arith.constant 9.99999974E-6 : f32
    %87 = vector.broadcast %cst_42 : f32 to vector<8x1xf32>
    %88 = arith.addf %84, %87 : vector<8x1xf32>
    %89 = math.rsqrt %88 : vector<8x1xf32>
    %90 = vector.broadcast %89 : vector<8x1xf32> to vector<8x32xf32>
    %91 = arith.mulf %86, %90 : vector<8x32xf32>
    %92 = vector.broadcast %72 : vector<1x32xf32> to vector<8x32xf32>
    %93 = arith.mulf %91, %92 : vector<8x32xf32>
    %94 = vector.broadcast %73 : vector<1x32xf32> to vector<8x32xf32>
    %95 = arith.addf %93, %94 : vector<8x32xf32>
    %c0_43 = arith.constant 0 : index
    %c0_44 = arith.constant 0 : index
    %96 = vector.load %arg12[%c0_43, %c0_44] : memref<32x64xf32, #tpu.memory_space<vmem>>, vector<32x64xf32>
    %cst_45 = arith.constant dense<0.000000e+00> : vector<8x64xf32>
    %97 = tpu.matmul %95, %96, %cst_45 {dimension_numbers = #tpu.dot_dimension_numbers<[1], [0], [0], [1], [0, 0, 1, 1], [], []>} : vector<8x32xf32>, vector<32x64xf32>, vector<8x64xf32> -> vector<8x64xf32>
    %c0_46 = arith.constant 0 : index
    %c0_47 = arith.constant 0 : index
    %98 = vector.load %arg13[%c0_46, %c0_47] : memref<1x64xf32, #tpu.memory_space<vmem>>, vector<1x64xf32>
    %99 = vector.broadcast %98 : vector<1x64xf32> to vector<8x64xf32>
    %100 = arith.addf %97, %99 : vector<8x64xf32>
    %cst_48 = arith.constant 5.000000e-01 : f32
    %101 = vector.broadcast %cst_48 : f32 to vector<8x64xf32>
    %102 = arith.mulf %101, %100 : vector<8x64xf32>
    %cst_49 = arith.constant 0.707106769 : f32
    %103 = vector.broadcast %cst_49 : f32 to vector<8x64xf32>
    %104 = arith.mulf %100, %103 : vector<8x64xf32>
    %105 = math.absf %104 : vector<8x64xf32>
    %cst_50 = arith.constant 0.327591091 : f32
    %106 = vector.broadcast %cst_50 : f32 to vector<8x64xf32>
    %107 = arith.mulf %106, %105 : vector<8x64xf32>
    %cst_51 = arith.constant 1.000000e+00 : f32
    %108 = vector.broadcast %cst_51 : f32 to vector<8x64xf32>
    %109 = arith.addf %108, %107 : vector<8x64xf32>
    %cst_52 = arith.constant 1.000000e+00 : f32
    %110 = vector.broadcast %cst_52 : f32 to vector<8x64xf32>
    %111 = arith.divf %110, %109 : vector<8x64xf32>
    %cst_53 = arith.constant 1.06140542 : f32
    %112 = vector.broadcast %cst_53 : f32 to vector<8x64xf32>
    %113 = arith.mulf %112, %111 : vector<8x64xf32>
    %cst_54 = arith.constant -1.45315206 : f32
    %114 = vector.broadcast %cst_54 : f32 to vector<8x64xf32>
    %115 = arith.addf %113, %114 : vector<8x64xf32>
    %116 = arith.mulf %115, %111 : vector<8x64xf32>
    %cst_55 = arith.constant 1.42141378 : f32
    %117 = vector.broadcast %cst_55 : f32 to vector<8x64xf32>
    %118 = arith.addf %116, %117 : vector<8x64xf32>
    %119 = arith.mulf %118, %111 : vector<8x64xf32>
    %cst_56 = arith.constant -0.284496725 : f32
    %120 = vector.broadcast %cst_56 : f32 to vector<8x64xf32>
    %121 = arith.addf %119, %120 : vector<8x64xf32>
    %122 = arith.mulf %121, %111 : vector<8x64xf32>
    %cst_57 = arith.constant 0.254829586 : f32
    %123 = vector.broadcast %cst_57 : f32 to vector<8x64xf32>
    %124 = arith.addf %122, %123 : vector<8x64xf32>
    %125 = arith.mulf %124, %111 : vector<8x64xf32>
    %cst_58 = arith.constant 0.000000e+00 : f32
    %126 = vector.broadcast %cst_58 : f32 to vector<8x64xf32>
    %127 = arith.subf %126, %105 : vector<8x64xf32>
    %128 = arith.mulf %127, %105 : vector<8x64xf32>
    %129 = math.exp %128 : vector<8x64xf32>
    %130 = arith.mulf %125, %129 : vector<8x64xf32>
    %cst_59 = arith.constant 1.000000e+00 : f32
    %131 = vector.broadcast %cst_59 : f32 to vector<8x64xf32>
    %132 = arith.subf %131, %130 : vector<8x64xf32>
    %cst_60 = arith.constant 0.000000e+00 : f32
    %133 = vector.broadcast %cst_60 : f32 to vector<8x64xf32>
    %134 = arith.cmpf oge, %104, %133 : vector<8x64xf32>
    %cst_61 = arith.constant 0.000000e+00 : f32
    %135 = vector.broadcast %cst_61 : f32 to vector<8x64xf32>
    %136 = arith.subf %135, %132 : vector<8x64xf32>
    %137 = arith.select %134, %132, %136 : vector<8x64xi1>, vector<8x64xf32>
    %cst_62 = arith.constant 1.000000e+00 : f32
    %138 = vector.broadcast %cst_62 : f32 to vector<8x64xf32>
    %139 = arith.addf %138, %137 : vector<8x64xf32>
    %140 = arith.mulf %102, %139 : vector<8x64xf32>
    %c0_63 = arith.constant 0 : index
    %c0_64 = arith.constant 0 : index
    %141 = vector.load %arg14[%c0_63, %c0_64] : memref<64x32xf32, #tpu.memory_space<vmem>>, vector<64x32xf32>
    %cst_65 = arith.constant dense<0.000000e+00> : vector<8x32xf32>
    %142 = tpu.matmul %140, %141, %cst_65 {dimension_numbers = #tpu.dot_dimension_numbers<[1], [0], [0], [1], [0, 0, 1, 1], [], []>} : vector<8x64xf32>, vector<64x32xf32>, vector<8x32xf32> -> vector<8x32xf32>
    %c0_66 = arith.constant 0 : index
    %c0_67 = arith.constant 0 : index
    %143 = vector.load %arg15[%c0_66, %c0_67] : memref<1x32xf32, #tpu.memory_space<vmem>>, vector<1x32xf32>
    %144 = vector.broadcast %143 : vector<1x32xf32> to vector<8x32xf32>
    %145 = arith.addf %142, %144 : vector<8x32xf32>
    %146 = arith.addf %145, %95 : vector<8x32xf32>
    %c0_68 = arith.constant 0 : index
    %c0_69 = arith.constant 0 : index
    %147 = vector.load %arg16[%c0_68, %c0_69] : memref<1x32xf32, #tpu.memory_space<vmem>>, vector<1x32xf32>
    %c0_70 = arith.constant 0 : index
    %c0_71 = arith.constant 0 : index
    %148 = vector.load %arg17[%c0_70, %c0_71] : memref<1x32xf32, #tpu.memory_space<vmem>>, vector<1x32xf32>
    %cst_72 = arith.constant dense<0.000000e+00> : vector<8xf32>
    %149 = vector.multi_reduction <add>, %146, %cst_72 [1] : vector<8x32xf32> to vector<8xf32>
    %150 = vector.shape_cast %149 : vector<8xf32> to vector<8x1xf32>
    %cst_73 = arith.constant 3.200000e+01 : f32
    %151 = vector.broadcast %cst_73 : f32 to vector<8x1xf32>
    %152 = arith.divf %150, %151 : vector<8x1xf32>
    %153 = vector.broadcast %152 : vector<8x1xf32> to vector<8x32xf32>
    %154 = arith.subf %146, %153 : vector<8x32xf32>
    %155 = arith.mulf %154, %154 : vector<8x32xf32>
    %cst_74 = arith.constant dense<0.000000e+00> : vector<8xf32>
    %156 = vector.multi_reduction <add>, %155, %cst_74 [1] : vector<8x32xf32> to vector<8xf32>
    %157 = vector.shape_cast %156 : vector<8xf32> to vector<8x1xf32>
    %cst_75 = arith.constant 3.200000e+01 : f32
    %158 = vector.broadcast %cst_75 : f32 to vector<8x1xf32>
    %159 = arith.divf %157, %158 : vector<8x1xf32>
    %160 = vector.broadcast %152 : vector<8x1xf32> to vector<8x32xf32>
    %161 = arith.subf %146, %160 : vector<8x32xf32>
    %cst_76 = arith.constant 9.99999974E-6 : f32
    %162 = vector.broadcast %cst_76 : f32 to vector<8x1xf32>
    %163 = arith.addf %159, %162 : vector<8x1xf32>
    %164 = math.rsqrt %163 : vector<8x1xf32>
    %165 = vector.broadcast %164 : vector<8x1xf32> to vector<8x32xf32>
    %166 = arith.mulf %161, %165 : vector<8x32xf32>
    %167 = vector.broadcast %147 : vector<1x32xf32> to vector<8x32xf32>
    %168 = arith.mulf %166, %167 : vector<8x32xf32>
    %169 = vector.broadcast %148 : vector<1x32xf32> to vector<8x32xf32>
    %170 = arith.addf %168, %169 : vector<8x32xf32>
    %c0_77 = arith.constant 0 : index
    %c0_78 = arith.constant 0 : index
    %c0_79 = arith.constant 0 : index
    %171 = vector.load %arg18[%c0_77, %c0_78, %c0_79] : memref<1x8x32xf32, #tpu.memory_space<vmem>>, vector<1x8x32xf32>
    %172 = vector.shape_cast %171 : vector<1x8x32xf32> to vector<8x32xf32>
    %173 = vector.shape_cast %170 : vector<8x32xf32> to vector<1x8x32xf32>
    tpu.vector_store %arg18[%c0_77, %c0_78, %c0_79], %173 {strides = array<i32>} : memref<1x8x32xf32, #tpu.memory_space<vmem>>, vector<1x8x32xf32>,
    return
  }
  func.func @transform_0(%arg0: i32) -> (i32, i32, i32) {
    %c0_i32 = arith.constant 0 : i32
    %c0_i32_0 = arith.constant 0 : i32
    %c0_i32_1 = arith.constant 0 : i32
    return %arg0, %c0_i32, %c0_i32_0 : i32, i32, i32
  }
  func.func @transform_1(%arg0: i32) -> (i32, i32, i32) {
    %c0_i32 = arith.constant 0 : i32
    %c0_i32_0 = arith.constant 0 : i32
    %c0_i32_1 = arith.constant 0 : i32
    return %arg0, %c0_i32, %c0_i32_0 : i32, i32, i32
  }
  func.func @transform_2(%arg0: i32) -> (i32, i32, i32) {
    %c0_i32 = arith.constant 0 : i32
    %c0_i32_0 = arith.constant 0 : i32
    %c0_i32_1 = arith.constant 0 : i32
    return %arg0, %c0_i32, %c0_i32_0 : i32, i32, i32
  }
  func.func @transform_3(%arg0: i32) -> (i32, i32, i32) {
    %c0_i32 = arith.constant 0 : i32
    %c0_i32_0 = arith.constant 0 : i32
    %c0_i32_1 = arith.constant 0 : i32
    return %arg0, %c0_i32, %c0_i32_0 : i32, i32, i32
  }
  func.func @transform_4(%arg0: i32) -> (i32, i32) {
    %c0_i32 = arith.constant 0 : i32
    %c0_i32_0 = arith.constant 0 : i32
    %c0_i32_1 = arith.constant 0 : i32
    return %c0_i32, %c0_i32_0 : i32, i32
  }
  func.func @transform_5(%arg0: i32) -> (i32, i32) {
    %c0_i32 = arith.constant 0 : i32
    %c0_i32_0 = arith.constant 0 : i32
    %c0_i32_1 = arith.constant 0 : i32
    return %c0_i32, %c0_i32_0 : i32, i32
  }
  func.func @transform_6(%arg0: i32) -> (i32, i32) {
    %c0_i32 = arith.constant 0 : i32
    %c0_i32_0 = arith.constant 0 : i32
    %c0_i32_1 = arith.constant 0 : i32
    return %c0_i32, %c0_i32_0 : i32, i32
  }
  func.func @transform_7(%arg0: i32) -> (i32, i32, i32) {
    %c0_i32 = arith.constant 0 : i32
    %c0_i32_0 = arith.constant 0 : i32
    %c0_i32_1 = arith.constant 0 : i32
    %c0_i32_2 = arith.constant 0 : i32
    return %c0_i32, %c0_i32_0, %c0_i32_1 : i32, i32, i32
  }
  func.func @transform_8(%arg0: i32) -> (i32, i32) {
    %c0_i32 = arith.constant 0 : i32
    %c0_i32_0 = arith.constant 0 : i32
    %c0_i32_1 = arith.constant 0 : i32
    return %c0_i32, %c0_i32_0 : i32, i32
  }
  func.func @transform_9(%arg0: i32) -> (i32, i32) {
    %c0_i32 = arith.constant 0 : i32
    %c0_i32_0 = arith.constant 0 : i32
    %c0_i32_1 = arith.constant 0 : i32
    return %c0_i32, %c0_i32_0 : i32, i32
  }
  func.func @transform_10(%arg0: i32) -> (i32, i32) {
    %c0_i32 = arith.constant 0 : i32
    %c0_i32_0 = arith.constant 0 : i32
    %c0_i32_1 = arith.constant 0 : i32
    return %c0_i32, %c0_i32_0 : i32, i32
  }
  func.func @transform_11(%arg0: i32) -> (i32, i32) {
    %c0_i32 = arith.constant 0 : i32
    %c0_i32_0 = arith.constant 0 : i32
    %c0_i32_1 = arith.constant 0 : i32
    return %c0_i32, %c0_i32_0 : i32, i32
  }
  func.func @transform_12(%arg0: i32) -> (i32, i32) {
    %c0_i32 = arith.constant 0 : i32
    %c0_i32_0 = arith.constant 0 : i32
    %c0_i32_1 = arith.constant 0 : i32
    return %c0_i32, %c0_i32_0 : i32, i32
  }
  func.func @transform_13(%arg0: i32) -> (i32, i32) {
    %c0_i32 = arith.constant 0 : i32
    %c0_i32_0 = arith.constant 0 : i32
    %c0_i32_1 = arith.constant 0 : i32
    return %c0_i32, %c0_i32_0 : i32, i32
  }
  func.func @transform_14(%arg0: i32) -> (i32, i32) {
    %c0_i32 = arith.constant 0 : i32
    %c0_i32_0 = arith.constant 0 : i32
    %c0_i32_1 = arith.constant 0 : i32
    return %c0_i32, %c0_i32_0 : i32, i32
  }
  func.func @transform_15(%arg0: i32) -> (i32, i32) {
    %c0_i32 = arith.constant 0 : i32
    %c0_i32_0 = arith.constant 0 : i32
    %c0_i32_1 = arith.constant 0 : i32
    return %c0_i32, %c0_i32_0 : i32, i32
  }
  func.func @transform_16(%arg0: i32) -> (i32, i32) {
    %c0_i32 = arith.constant 0 : i32
    %c0_i32_0 = arith.constant 0 : i32
    %c0_i32_1 = arith.constant 0 : i32
    return %c0_i32, %c0_i32_0 : i32, i32
  }
  func.func @transform_17(%arg0: i32) -> (i32, i32, i32) {
    %c0_i32 = arith.constant 0 : i32
    %c0_i32_0 = arith.constant 0 : i32
    %c0_i32_1 = arith.constant 0 : i32
    return %arg0, %c0_i32, %c0_i32_0 : i32, i32, i32
  }
}

</mosaic_0001>

<llo_original>
// kernel: tpu_custom_call.1
$region0: #{tpu_custom_call.1}
  #allocation0 [shape = 'u32[]', space=smem, size = 0x4, offset = 0x4, fixed_abs, tag = 'smem constant byte address 0x4 - core index']
  #allocation1 [shape = 'u32[72,128]{1,0:T(1,128)}', space=vmem, size = 0x9000, scoped, tag = 'internal scratch']
  %s0 = inlined_call_operand.vmem [shape: f32[2,8,32], index: 0, kind: input, shape index: {}]
  %s1 = inlined_call_operand.vmem [shape: f32[2,32,1], index: 1, kind: input, shape index: {}]
  %s2 = inlined_call_operand.vmem [shape: f32[2,32,16], index: 2, kind: input, shape index: {}]
  %s3 = inlined_call_operand.vmem [shape: f32[2,32,32], index: 3, kind: input, shape index: {}]
  %s4 = inlined_call_operand.vmem [shape: f32[32,96], index: 4, kind: input, shape index: {}]
  %s5 = inlined_call_operand.vmem [shape: f32[1,96], index: 5, kind: input, shape index: {}]
  %s6 = inlined_call_operand.vmem [shape: f32[8,16], index: 6, kind: input, shape index: {}]
  %s7 = inlined_call_operand.vmem [shape: f32[4,8,32], index: 7, kind: input, shape index: {}]
  %s8 = inlined_call_operand.vmem [shape: f32[1,32], index: 8, kind: input, shape index: {}]
  %s9 = inlined_call_operand.vmem [shape: f32[1,32], index: 9, kind: input, shape index: {}]
  %s10 = inlined_call_operand.vmem [shape: f32[1,32], index: 10, kind: input, shape index: {}]
  %s11 = inlined_call_operand.vmem [shape: f32[32,64], index: 11, kind: input, shape index: {}]
  %s12 = inlined_call_operand.vmem [shape: f32[1,64], index: 12, kind: input, shape index: {}]
  %s13 = inlined_call_operand.vmem [shape: f32[64,32], index: 13, kind: input, shape index: {}]
  %s14 = inlined_call_operand.vmem [shape: f32[1,32], index: 14, kind: input, shape index: {}]
  %s15 = inlined_call_operand.vmem [shape: f32[1,32], index: 15, kind: input, shape index: {}]
  %s16 = inlined_call_operand.vmem [shape: f32[1,32], index: 16, kind: input, shape index: {}]
  %s17 = inlined_call_operand.hbm [shape: f32[2,8,32], index: 17, kind: output, shape index: {}]
  %s18 = sld [smem:[#allocation0]]
  $region101: #{tpu_custom_call.1} parent=0
    _
  %s20 = ssub.s32 1, %s18
  %s21 = scalar_select 0, %s20, %s18
  $region1: #{tpu_custom_call.1} parent=0
    #allocation2 [shape = 'u8[8192]{0}', space=vmem, size = 0x2000, scoped, tag = 'output window, operand 0']
    #allocation3 [shape = 's32[2]{0}', space=sflag, size = 0x8, scoped, tag = 'scoped memory for tpu_custom_call.1']
    %22 = vsyncpa [#allocation3], 0
    %s23 = scalar_lea.sflag [#allocation3], 1
    %24 = vsyncpa %s23, 0
    loop: start=0, step=1, limit=4
    $region2: #{tpu_custom_call.1} parent=1 // loop_pre_header
      _
    $region3: #{tpu_custom_call.1} parent=1 // loop_header
      %s26 = sphi 0, %s30
      %p27 = scmp.ge.s32.totalorder %s26, 4
      %s36 = sphi 0, %s38
      %s39 = sphi 0, %s36
      %s40 = sphi 0, %s39
      %s56 = sphi 0, %s40
      %s62 = sphi 0, %s64
      %s65 = sphi 0, %s62
      %s66 = sphi 0, %s65
      %s82 = sphi 0, %s66
      %s88 = sphi 0, %s90
      %s91 = sphi 0, %s88
      %s92 = sphi 0, %s91
      %s108 = sphi 0, %s92
      %s114 = sphi 0, %s116
      %s117 = sphi 0, %s114
      %s118 = sphi 0, %s117
      %s134 = sphi 0, %s118
      %s138 = sphi 0, %s138
      %s140 = sphi 0, %s138
      %s141 = sphi 0, %s140
      %s155 = sphi 0, %s141
      %s159 = sphi 0, %s159
      %s161 = sphi 0, %s159
      %s162 = sphi 0, %s161
      %s176 = sphi 0, %s162
      %s180 = sphi 0, %s180
      %s182 = sphi 0, %s180
      %s183 = sphi 0, %s182
      %s197 = sphi 0, %s183
      %s201 = sphi 0, %s201
      %s203 = sphi 0, %s201
      %s204 = sphi 0, %s203
      %s218 = sphi 0, %s204
      %s222 = sphi 0, %s222
      %s224 = sphi 0, %s222
      %s225 = sphi 0, %s224
      %s239 = sphi 0, %s225
      %s243 = sphi 0, %s243
      %s245 = sphi 0, %s243
      %s246 = sphi 0, %s245
      %s260 = sphi 0, %s246
      %s264 = sphi 0, %s264
      %s266 = sphi 0, %s264
      %s267 = sphi 0, %s266
      %s281 = sphi 0, %s267
      %s285 = sphi 0, %s285
      %s287 = sphi 0, %s285
      %s288 = sphi 0, %s287
      %s302 = sphi 0, %s288
      %s306 = sphi 0, %s306
      %s308 = sphi 0, %s306
      %s309 = sphi 0, %s308
      %s323 = sphi 0, %s309
      %s327 = sphi 0, %s327
      %s329 = sphi 0, %s327
      %s330 = sphi 0, %s329
      %s344 = sphi 0, %s330
      %s348 = sphi 0, %s348
      %s350 = sphi 0, %s348
      %s351 = sphi 0, %s350
      %s365 = sphi 0, %s351
      %s369 = sphi 0, %s369
      %s371 = sphi 0, %s369
      %s372 = sphi 0, %s371
      %s386 = sphi 0, %s372
      %s390 = sphi 0, %s390
      %s392 = sphi 0, %s390
      %s393 = sphi 0, %s392
      %s407 = sphi 0, %s393
      %s413 = sphi 0, %s415
      %s416 = sphi 0, %s413
      %s417 = sphi 0, %s416
      %s433 = sphi 0, %s417
    $region4: #{tpu_custom_call.1} parent=1 // loop_header_branch
      %29 = sbr.rel (%p27) target = $region8
    $region5: #{tpu_custom_call.1} parent=1 // loop_body
      %s31 = ssub.s32 %s26, 1
      %s32 = ssub.s32 %s26, 2
      %s33 = sadd.s32 %s26, 1
      %s34 = ssub.s32 %s26, %s33
      %p35 = scmp.eq.s32.totalorder %s34, 0
      %s37 = sadd.s32 %s36, 1
      %s38 = scalar_select %p35, %s36, %s37
      %p41 = pneg %p35
      %p42 = scmp.eq.s32.totalorder %s26, 1
      %p43 = por %p41, %p42
      %p44 = scmp.ne.s32.totalorder %s36, %s39
      %p45 = scmp.eq.s32.totalorder %s26, 0
      %p46 = por %p44, %p45
      %p47 = scmp.ne.s32.totalorder %s36, %s39
      %p48 = scmp.eq.s32.totalorder %s31, 1
      %p49 = por %p47, %p48
      %p50 = scmp.ne.s32.totalorder %s39, %s40
      %p51 = scmp.eq.s32.totalorder %s31, 0
      %p52 = por %p50, %p51
      %p53 = scmp.ne.s32.totalorder %s39, %s40
      %p54 = scmp.eq.s32.totalorder %s32, 1
      %p55 = por %p53, %p54
      %p57 = scmp.ne.s32.totalorder %s40, %s56
      %p58 = scmp.eq.s32.totalorder %s32, 0
      %p59 = por %p57, %p58
      %s60 = ssub.s32 %s26, %s33
      %p61 = scmp.eq.s32.totalorder %s60, 0
      %s63 = sadd.s32 %s62, 1
      %s64 = scalar_select %p61, %s62, %s63
      %p67 = pneg %p61
      %p68 = scmp.eq.s32.totalorder %s26, 1
      %p69 = por %p67, %p68
      %p70 = scmp.ne.s32.totalorder %s62, %s65
      %p71 = scmp.eq.s32.totalorder %s26, 0
      %p72 = por %p70, %p71
      %p73 = scmp.ne.s32.totalorder %s62, %s65
      %p74 = scmp.eq.s32.totalorder %s31, 1
      %p75 = por %p73, %p74
      %p76 = scmp.ne.s32.totalorder %s65, %s66
      %p77 = scmp.eq.s32.totalorder %s31, 0
      %p78 = por %p76, %p77
      %p79 = scmp.ne.s32.totalorder %s65, %s66
      %p80 = scmp.eq.s32.totalorder %s32, 1
      %p81 = por %p79, %p80
      %p83 = scmp.ne.s32.totalorder %s66, %s82
      %p84 = scmp.eq.s32.totalorder %s32, 0
      %p85 = por %p83, %p84
      %s86 = ssub.s32 %s26, %s33
      %p87 = scmp.eq.s32.totalorder %s86, 0
      %s89 = sadd.s32 %s88, 1
      %s90 = scalar_select %p87, %s88, %s89
      %p93 = pneg %p87
      %p94 = scmp.eq.s32.totalorder %s26, 1
      %p95 = por %p93, %p94
      %p96 = scmp.ne.s32.totalorder %s88, %s91
      %p97 = scmp.eq.s32.totalorder %s26, 0
      %p98 = por %p96, %p97
      %p99 = scmp.ne.s32.totalorder %s88, %s91
      %p100 = scmp.eq.s32.totalorder %s31, 1
      %p101 = por %p99, %p100
      %p102 = scmp.ne.s32.totalorder %s91, %s92
      %p103 = scmp.eq.s32.totalorder %s31, 0
      %p104 = por %p102, %p103
      %p105 = scmp.ne.s32.totalorder %s91, %s92
      %p106 = scmp.eq.s32.totalorder %s32, 1
      %p107 = por %p105, %p106
      %p109 = scmp.ne.s32.totalorder %s92, %s108
      %p110 = scmp.eq.s32.totalorder %s32, 0
      %p111 = por %p109, %p110
      %s112 = ssub.s32 %s26, %s33
      %p113 = scmp.eq.s32.totalorder %s112, 0
      %s115 = sadd.s32 %s114, 1
      %s116 = scalar_select %p113, %s114, %s115
      %p119 = pneg %p113
      %p120 = scmp.eq.s32.totalorder %s26, 1
      %p121 = por %p119, %p120
      %p122 = scmp.ne.s32.totalorder %s114, %s117
      %p123 = scmp.eq.s32.totalorder %s26, 0
      %p124 = por %p122, %p123
      %p125 = scmp.ne.s32.totalorder %s114, %s117
      %p126 = scmp.eq.s32.totalorder %s31, 1
      %p127 = por %p125, %p126
      %p128 = scmp.ne.s32.totalorder %s117, %s118
      %p129 = scmp.eq.s32.totalorder %s31, 0
      %p130 = por %p128, %p129
      %p131 = scmp.ne.s32.totalorder %s117, %s118
      %p132 = scmp.eq.s32.totalorder %s32, 1
      %p133 = por %p131, %p132
      %p135 = scmp.ne.s32.totalorder %s118, %s134
      %p136 = scmp.eq.s32.totalorder %s32, 0
      %p137 = por %p135, %p136
      %s139 = sadd.s32 %s138, 1
      %p142 = scmp.eq.s32.totalorder %s26, 1
      %p143 = scmp.ne.s32.totalorder %s138, %s140
      %p144 = scmp.eq.s32.totalorder %s26, 0
      %p145 = por %p143, %p144
      %p146 = scmp.ne.s32.totalorder %s138, %s140
      %p147 = scmp.eq.s32.totalorder %s31, 1
      %p148 = por %p146, %p147
      %p149 = scmp.ne.s32.totalorder %s140, %s141
      %p150 = scmp.eq.s32.totalorder %s31, 0
      %p151 = por %p149, %p150
      %p152 = scmp.ne.s32.totalorder %s140, %s141
      %p153 = scmp.eq.s32.totalorder %s32, 1
      %p154 = por %p152, %p153
      %p156 = scmp.ne.s32.totalorder %s141, %s155
      %p157 = scmp.eq.s32.totalorder %s32, 0
      %p158 = por %p156, %p157
      %s160 = sadd.s32 %s159, 1
      %p163 = scmp.eq.s32.totalorder %s26, 1
      %p164 = scmp.ne.s32.totalorder %s159, %s161
      %p165 = scmp.eq.s32.totalorder %s26, 0
      %p166 = por %p164, %p165
      %p167 = scmp.ne.s32.totalorder %s159, %s161
      %p168 = scmp.eq.s32.totalorder %s31, 1
      %p169 = por %p167, %p168
      %p170 = scmp.ne.s32.totalorder %s161, %s162
      %p171 = scmp.eq.s32.totalorder %s31, 0
      %p172 = por %p170, %p171
      %p173 = scmp.ne.s32.totalorder %s161, %s162
      %p174 = scmp.eq.s32.totalorder %s32, 1
      %p175 = por %p173, %p174
      %p177 = scmp.ne.s32.totalorder %s162, %s176
      %p178 = scmp.eq.s32.totalorder %s32, 0
      %p179 = por %p177, %p178
      %s181 = sadd.s32 %s180, 1
      %p184 = scmp.eq.s32.totalorder %s26, 1
      %p185 = scmp.ne.s32.totalorder %s180, %s182
      %p186 = scmp.eq.s32.totalorder %s26, 0
      %p187 = por %p185, %p186
      %p188 = scmp.ne.s32.totalorder %s180, %s182
      %p189 = scmp.eq.s32.totalorder %s31, 1
      %p190 = por %p188, %p189
      %p191 = scmp.ne.s32.totalorder %s182, %s183
      %p192 = scmp.eq.s32.totalorder %s31, 0
      %p193 = por %p191, %p192
      %p194 = scmp.ne.s32.totalorder %s182, %s183
      %p195 = scmp.eq.s32.totalorder %s32, 1
      %p196 = por %p194, %p195
      %p198 = scmp.ne.s32.totalorder %s183, %s197
      %p199 = scmp.eq.s32.totalorder %s32, 0
      %p200 = por %p198, %p199
      %s202 = sadd.s32 %s201, 1
      %p205 = scmp.eq.s32.totalorder %s26, 1
      %p206 = scmp.ne.s32.totalorder %s201, %s203
      %p207 = scmp.eq.s32.totalorder %s26, 0
      %p208 = por %p206, %p207
      %p209 = scmp.ne.s32.totalorder %s201, %s203
      %p210 = scmp.eq.s32.totalorder %s31, 1
      %p211 = por %p209, %p210
      %p212 = scmp.ne.s32.totalorder %s203, %s204
      %p213 = scmp.eq.s32.totalorder %s31, 0
      %p214 = por %p212, %p213
      %p215 = scmp.ne.s32.totalorder %s203, %s204
      %p216 = scmp.eq.s32.totalorder %s32, 1
      %p217 = por %p215, %p216
      %p219 = scmp.ne.s32.totalorder %s204, %s218
      %p220 = scmp.eq.s32.totalorder %s32, 0
      %p221 = por %p219, %p220
      %s223 = sadd.s32 %s222, 1
      %p226 = scmp.eq.s32.totalorder %s26, 1
      %p227 = scmp.ne.s32.totalorder %s222, %s224
      %p228 = scmp.eq.s32.totalorder %s26, 0
      %p229 = por %p227, %p228
      %p230 = scmp.ne.s32.totalorder %s222, %s224
      %p231 = scmp.eq.s32.totalorder %s31, 1
      %p232 = por %p230, %p231
      %p233 = scmp.ne.s32.totalorder %s224, %s225
      %p234 = scmp.eq.s32.totalorder %s31, 0
      %p235 = por %p233, %p234
      %p236 = scmp.ne.s32.totalorder %s224, %s225
      %p237 = scmp.eq.s32.totalorder %s32, 1
      %p238 = por %p236, %p237
      %p240 = scmp.ne.s32.totalorder %s225, %s239
      %p241 = scmp.eq.s32.totalorder %s32, 0
      %p242 = por %p240, %p241
      %s244 = sadd.s32 %s243, 1
      %p247 = scmp.eq.s32.totalorder %s26, 1
      %p248 = scmp.ne.s32.totalorder %s243, %s245
      %p249 = scmp.eq.s32.totalorder %s26, 0
      %p250 = por %p248, %p249
      %p251 = scmp.ne.s32.totalorder %s243, %s245
      %p252 = scmp.eq.s32.totalorder %s31, 1
      %p253 = por %p251, %p252
      %p254 = scmp.ne.s32.totalorder %s245, %s246
      %p255 = scmp.eq.s32.totalorder %s31, 0
      %p256 = por %p254, %p255
      %p257 = scmp.ne.s32.totalorder %s245, %s246
      %p258 = scmp.eq.s32.totalorder %s32, 1
      %p259 = por %p257, %p258
      %p261 = scmp.ne.s32.totalorder %s246, %s260
      %p262 = scmp.eq.s32.totalorder %s32, 0
      %p263 = por %p261, %p262
      %s265 = sadd.s32 %s264, 1
      %p268 = scmp.eq.s32.totalorder %s26, 1
      %p269 = scmp.ne.s32.totalorder %s264, %s266
      %p270 = scmp.eq.s32.totalorder %s26, 0
      %p271 = por %p269, %p270
      %p272 = scmp.ne.s32.totalorder %s264, %s266
      %p273 = scmp.eq.s32.totalorder %s31, 1
      %p274 = por %p272, %p273
      %p275 = scmp.ne.s32.totalorder %s266, %s267
      %p276 = scmp.eq.s32.totalorder %s31, 0
      %p277 = por %p275, %p276
      %p278 = scmp.ne.s32.totalorder %s266, %s267
      %p279 = scmp.eq.s32.totalorder %s32, 1
      %p280 = por %p278, %p279
      %p282 = scmp.ne.s32.totalorder %s267, %s281
      %p283 = scmp.eq.s32.totalorder %s32, 0
      %p284 = por %p282, %p283
      %s286 = sadd.s32 %s285, 1
      %p289 = scmp.eq.s32.totalorder %s26, 1
      %p290 = scmp.ne.s32.totalorder %s285, %s287
      %p291 = scmp.eq.s32.totalorder %s26, 0
      %p292 = por %p290, %p291
      %p293 = scmp.ne.s32.totalorder %s285, %s287
      %p294 = scmp.eq.s32.totalorder %s31, 1
      %p295 = por %p293, %p294
      %p296 = scmp.ne.s32.totalorder %s287, %s288
      %p297 = scmp.eq.s32.totalorder %s31, 0
      %p298 = por %p296, %p297
      %p299 = scmp.ne.s32.totalorder %s287, %s288
      %p300 = scmp.eq.s32.totalorder %s32, 1
      %p301 = por %p299, %p300
      %p303 = scmp.ne.s32.totalorder %s288, %s302
      %p304 = scmp.eq.s32.totalorder %s32, 0
      %p305 = por %p303, %p304
      %s307 = sadd.s32 %s306, 1
      %p310 = scmp.eq.s32.totalorder %s26, 1
      %p311 = scmp.ne.s32.totalorder %s306, %s308
      %p312 = scmp.eq.s32.totalorder %s26, 0
      %p313 = por %p311, %p312
      %p314 = scmp.ne.s32.totalorder %s306, %s308
      %p315 = scmp.eq.s32.totalorder %s31, 1
      %p316 = por %p314, %p315
      %p317 = scmp.ne.s32.totalorder %s308, %s309
      %p318 = scmp.eq.s32.totalorder %s31, 0
      %p319 = por %p317, %p318
      %p320 = scmp.ne.s32.totalorder %s308, %s309
      %p321 = scmp.eq.s32.totalorder %s32, 1
      %p322 = por %p320, %p321
      %p324 = scmp.ne.s32.totalorder %s309, %s323
      %p325 = scmp.eq.s32.totalorder %s32, 0
      %p326 = por %p324, %p325
      %s328 = sadd.s32 %s327, 1
      %p331 = scmp.eq.s32.totalorder %s26, 1
      %p332 = scmp.ne.s32.totalorder %s327, %s329
      %p333 = scmp.eq.s32.totalorder %s26, 0
      %p334 = por %p332, %p333
      %p335 = scmp.ne.s32.totalorder %s327, %s329
      %p336 = scmp.eq.s32.totalorder %s31, 1
      %p337 = por %p335, %p336
      %p338 = scmp.ne.s32.totalorder %s329, %s330
      %p339 = scmp.eq.s32.totalorder %s31, 0
      %p340 = por %p338, %p339
      %p341 = scmp.ne.s32.totalorder %s329, %s330
      %p342 = scmp.eq.s32.totalorder %s32, 1
      %p343 = por %p341, %p342
      %p345 = scmp.ne.s32.totalorder %s330, %s344
      %p346 = scmp.eq.s32.totalorder %s32, 0
      %p347 = por %p345, %p346
      %s349 = sadd.s32 %s348, 1
      %p352 = scmp.eq.s32.totalorder %s26, 1
      %p353 = scmp.ne.s32.totalorder %s348, %s350
      %p354 = scmp.eq.s32.totalorder %s26, 0
      %p355 = por %p353, %p354
      %p356 = scmp.ne.s32.totalorder %s348, %s350
      %p357 = scmp.eq.s32.totalorder %s31, 1
      %p358 = por %p356, %p357
      %p359 = scmp.ne.s32.totalorder %s350, %s351
      %p360 = scmp.eq.s32.totalorder %s31, 0
      %p361 = por %p359, %p360
      %p362 = scmp.ne.s32.totalorder %s350, %s351
      %p363 = scmp.eq.s32.totalorder %s32, 1
      %p364 = por %p362, %p363
      %p366 = scmp.ne.s32.totalorder %s351, %s365
      %p367 = scmp.eq.s32.totalorder %s32, 0
      %p368 = por %p366, %p367
      %s370 = sadd.s32 %s369, 1
      %p373 = scmp.eq.s32.totalorder %s26, 1
      %p374 = scmp.ne.s32.totalorder %s369, %s371
      %p375 = scmp.eq.s32.totalorder %s26, 0
      %p376 = por %p374, %p375
      %p377 = scmp.ne.s32.totalorder %s369, %s371
      %p378 = scmp.eq.s32.totalorder %s31, 1
      %p379 = por %p377, %p378
      %p380 = scmp.ne.s32.totalorder %s371, %s372
      %p381 = scmp.eq.s32.totalorder %s31, 0
      %p382 = por %p380, %p381
      %p383 = scmp.ne.s32.totalorder %s371, %s372
      %p384 = scmp.eq.s32.totalorder %s32, 1
      %p385 = por %p383, %p384
      %p387 = scmp.ne.s32.totalorder %s372, %s386
      %p388 = scmp.eq.s32.totalorder %s32, 0
      %p389 = por %p387, %p388
      %s391 = sadd.s32 %s390, 1
      %p394 = scmp.eq.s32.totalorder %s26, 1
      %p395 = scmp.ne.s32.totalorder %s390, %s392
      %p396 = scmp.eq.s32.totalorder %s26, 0
      %p397 = por %p395, %p396
      %p398 = scmp.ne.s32.totalorder %s390, %s392
      %p399 = scmp.eq.s32.totalorder %s31, 1
      %p400 = por %p398, %p399
      %p401 = scmp.ne.s32.totalorder %s392, %s393
      %p402 = scmp.eq.s32.totalorder %s31, 0
      %p403 = por %p401, %p402
      %p404 = scmp.ne.s32.totalorder %s392, %s393
      %p405 = scmp.eq.s32.totalorder %s32, 1
      %p406 = por %p404, %p405
      %p408 = scmp.ne.s32.totalorder %s393, %s407
      %p409 = scmp.eq.s32.totalorder %s32, 0
      %p410 = por %p408, %p409
      %s411 = ssub.s32 %s26, %s33
      %p412 = scmp.eq.s32.totalorder %s411, 0
      %s414 = sadd.s32 %s413, 1
      %s415 = scalar_select %p412, %s413, %s414
      %p418 = pneg %p412
      %p419 = scmp.eq.s32.totalorder %s26, 1
      %p420 = por %p418, %p419
      %p421 = scmp.ne.s32.totalorder %s413, %s416
      %p422 = scmp.eq.s32.totalorder %s26, 0
      %p423 = por %p421, %p422
      %p424 = scmp.ne.s32.totalorder %s413, %s416
      %p425 = scmp.eq.s32.totalorder %s31, 1
      %p426 = por %p424, %p425
      %p427 = scmp.ne.s32.totalorder %s416, %s417
      %p428 = scmp.eq.s32.totalorder %s31, 0
      %p429 = por %p427, %p428
      %p430 = scmp.ne.s32.totalorder %s416, %s417
      %p431 = scmp.eq.s32.totalorder %s32, 1
      %p432 = por %p430, %p431
      %p434 = scmp.ne.s32.totalorder %s417, %s433
      %p435 = scmp.eq.s32.totalorder %s32, 0
      %p436 = por %p434, %p435
      %p437 = scmp.le.s32.totalorder 1, %s26
      %p438 = scmp.lt.s32.totalorder %s26, 3
      %p439 = pnand %p437, %p438
      %p440 = pneg %p439
      // Predicated region
      $region9: #{tpu_custom_call.1} parent=5 // pred_check
        _
      $region10: #{tpu_custom_call.1} parent=5 // pred_check_branch
        %442 = sbr.rel (%p439) target = $region12
      $region11: #{tpu_custom_call.1} parent=5 // pred_region
        %s443 = ssub.s32 %s26, 1
        // Predicated region
        $region13: #{tpu_custom_call.1} parent=11 // pred_check
          %p444 = pneg %p151
        $region14: #{tpu_custom_call.1} parent=11 // pred_check_branch
          %446 = sbr.rel (%p444) target = $region16
        $region15: #{tpu_custom_call.1} parent=11 // pred_region
          _
        $region16: #{tpu_custom_call.1} parent=11 // pred_fallthru
          _
        // Predicated region
        $region17: #{tpu_custom_call.1} parent=11 // pred_check
          %p447 = pneg %p172
        $region18: #{tpu_custom_call.1} parent=11 // pred_check_branch
          %449 = sbr.rel (%p447) target = $region20
        $region19: #{tpu_custom_call.1} parent=11 // pred_region
          _
        $region20: #{tpu_custom_call.1} parent=11 // pred_fallthru
          _
        // Predicated region
        $region21: #{tpu_custom_call.1} parent=11 // pred_check
          %p450 = pneg %p193
        $region22: #{tpu_custom_call.1} parent=11 // pred_check_branch
          %452 = sbr.rel (%p450) target = $region24
        $region23: #{tpu_custom_call.1} parent=11 // pred_region
          _
        $region24: #{tpu_custom_call.1} parent=11 // pred_fallthru
          _
        // Predicated region
        $region25: #{tpu_custom_call.1} parent=11 // pred_check
          %p453 = pneg %p214
        $region26: #{tpu_custom_call.1} parent=11 // pred_check_branch
          %455 = sbr.rel (%p453) target = $region28
        $region27: #{tpu_custom_call.1} parent=11 // pred_region
          _
        $region28: #{tpu_custom_call.1} parent=11 // pred_fallthru
          _
        // Predicated region
        $region29: #{tpu_custom_call.1} parent=11 // pred_check
          %p456 = pneg %p235
        $region30: #{tpu_custom_call.1} parent=11 // pred_check_branch
          %458 = sbr.rel (%p456) target = $region32
        $region31: #{tpu_custom_call.1} parent=11 // pred_region
          _
        $region32: #{tpu_custom_call.1} parent=11 // pred_fallthru
          _
        // Predicated region
        $region33: #{tpu_custom_call.1} parent=11 // pred_check
          %p459 = pneg %p256
        $region34: #{tpu_custom_call.1} parent=11 // pred_check_branch
          %461 = sbr.rel (%p459) target = $region36
        $region35: #{tpu_custom_call.1} parent=11 // pred_region
          _
        $region36: #{tpu_custom_call.1} parent=11 // pred_fallthru
          _
        // Predicated region
        $region37: #{tpu_custom_call.1} parent=11 // pred_check
          %p462 = pneg %p277
        $region38: #{tpu_custom_call.1} parent=11 // pred_check_branch
          %464 = sbr.rel (%p462) target = $region40
        $region39: #{tpu_custom_call.1} parent=11 // pred_region
          _
        $region40: #{tpu_custom_call.1} parent=11 // pred_fallthru
          _
        // Predicated region
        $region41: #{tpu_custom_call.1} parent=11 // pred_check
          %p465 = pneg %p298
        $region42: #{tpu_custom_call.1} parent=11 // pred_check_branch
          %467 = sbr.rel (%p465) target = $region44
        $region43: #{tpu_custom_call.1} parent=11 // pred_region
          _
        $region44: #{tpu_custom_call.1} parent=11 // pred_fallthru
          _
        // Predicated region
        $region45: #{tpu_custom_call.1} parent=11 // pred_check
          %p468 = pneg %p319
        $region46: #{tpu_custom_call.1} parent=11 // pred_check_branch
          %470 = sbr.rel (%p468) target = $region48
        $region47: #{tpu_custom_call.1} parent=11 // pred_region
          _
        $region48: #{tpu_custom_call.1} parent=11 // pred_fallthru
          _
        // Predicated region
        $region49: #{tpu_custom_call.1} parent=11 // pred_check
          %p471 = pneg %p340
        $region50: #{tpu_custom_call.1} parent=11 // pred_check_branch
          %473 = sbr.rel (%p471) target = $region52
        $region51: #{tpu_custom_call.1} parent=11 // pred_region
          _
        $region52: #{tpu_custom_call.1} parent=11 // pred_fallthru
          _
        // Predicated region
        $region53: #{tpu_custom_call.1} parent=11 // pred_check
          %p474 = pneg %p361
        $region54: #{tpu_custom_call.1} parent=11 // pred_check_branch
          %476 = sbr.rel (%p474) target = $region56
        $region55: #{tpu_custom_call.1} parent=11 // pred_region
          _
        $region56: #{tpu_custom_call.1} parent=11 // pred_fallthru
          _
        // Predicated region
        $region57: #{tpu_custom_call.1} parent=11 // pred_check
          %p477 = pneg %p382
        $region58: #{tpu_custom_call.1} parent=11 // pred_check_branch
          %479 = sbr.rel (%p477) target = $region60
        $region59: #{tpu_custom_call.1} parent=11 // pred_region
          _
        $region60: #{tpu_custom_call.1} parent=11 // pred_fallthru
          _
        // Predicated region
        $region61: #{tpu_custom_call.1} parent=11 // pred_check
          %p480 = pneg %p403
        $region62: #{tpu_custom_call.1} parent=11 // pred_check_branch
          %482 = sbr.rel (%p480) target = $region64
        $region63: #{tpu_custom_call.1} parent=11 // pred_region
          _
        $region64: #{tpu_custom_call.1} parent=11 // pred_fallthru
          _
      $region12: #{tpu_custom_call.1} parent=5 // pred_fallthru
        _
      %p483 = scmp.lt.s32.totalorder %s26, 2
      // Predicated region
      $region65: #{tpu_custom_call.1} parent=5 // pred_check
        %p484 = pneg %p483
      $region66: #{tpu_custom_call.1} parent=5 // pred_check_branch
        %486 = sbr.rel (%p484) target = $region68
      $region67: #{tpu_custom_call.1} parent=5 // pred_region
        // Predicated region
        $region69: #{tpu_custom_call.1} parent=67 // pred_check
          %p487 = pneg %p46
        $region70: #{tpu_custom_call.1} parent=67 // pred_check_branch
          %489 = sbr.rel (%p487) target = $region72
        $region71: #{tpu_custom_call.1} parent=67 // pred_region
          %p490 = scmp.lt.s32.totalorder %s26, 1
          %s491 = scalar_select %p490, %s26, 1
          %s492 = smul.addr %s491, 8
          %s493 = scalar_lea.vmem %s0, %s492
        $region72: #{tpu_custom_call.1} parent=67 // pred_fallthru
          _
        // Predicated region
        $region73: #{tpu_custom_call.1} parent=67 // pred_check
          %p494 = pneg %p72
        $region74: #{tpu_custom_call.1} parent=67 // pred_check_branch
          %496 = sbr.rel (%p494) target = $region76
        $region75: #{tpu_custom_call.1} parent=67 // pred_region
          %p497 = scmp.lt.s32.totalorder %s26, 1
          %s498 = scalar_select %p497, %s26, 1
          %s499 = smul.addr %s498, 4
          %s500 = smul.addr %s499, 8
          %s501 = scalar_lea.vmem %s1, %s500
        $region76: #{tpu_custom_call.1} parent=67 // pred_fallthru
          _
        // Predicated region
        $region77: #{tpu_custom_call.1} parent=67 // pred_check
          %p502 = pneg %p98
        $region78: #{tpu_custom_call.1} parent=67 // pred_check_branch
          %504 = sbr.rel (%p502) target = $region80
        $region79: #{tpu_custom_call.1} parent=67 // pred_region
          %p505 = scmp.lt.s32.totalorder %s26, 1
          %s506 = scalar_select %p505, %s26, 1
          %s507 = smul.addr %s506, 4
          %s508 = smul.addr %s507, 8
          %s509 = scalar_lea.vmem %s2, %s508
        $region80: #{tpu_custom_call.1} parent=67 // pred_fallthru
          _
        // Predicated region
        $region81: #{tpu_custom_call.1} parent=67 // pred_check
          %p510 = pneg %p124
        $region82: #{tpu_custom_call.1} parent=67 // pred_check_branch
          %512 = sbr.rel (%p510) target = $region84
        $region83: #{tpu_custom_call.1} parent=67 // pred_region
          %p513 = scmp.lt.s32.totalorder %s26, 1
          %s514 = scalar_select %p513, %s26, 1
          %s515 = smul.addr %s514, 4
          %s516 = smul.addr %s515, 8
          %s517 = scalar_lea.vmem %s3, %s516
        $region84: #{tpu_custom_call.1} parent=67 // pred_fallthru
          _
      $region68: #{tpu_custom_call.1} parent=5 // pred_fallthru
        _
      %p518 = scmp.le.s32.totalorder 1, %s26
      %p519 = scmp.lt.s32.totalorder %s26, 3
      %p520 = pnand %p518, %p519
      %p521 = pneg %p520
      // Predicated region
      $region85: #{tpu_custom_call.1} parent=5 // pred_check
        _
      $region86: #{tpu_custom_call.1} parent=5 // pred_check_branch
        %523 = sbr.rel (%p520) target = $region88
      $region87: #{tpu_custom_call.1} parent=5 // pred_region
        %s524 = ssub.s32 %s26, 1
        %p525 = scmp.lt.s32.totalorder %s31, 1
        %s526 = scalar_select %p525, %s31, 1
        %s527 = smul.addr %s526, 8
        %s528 = scalar_lea.vmem %s0, %s527
        %p529 = pneg %p52
        %p530 = pneg %p49
        %p531 = scmp.lt.s32.totalorder %s31, 1
        %s532 = scalar_select %p531, %s31, 1
        %s533 = smul.addr %s532, 4
        %s534 = smul.addr %s533, 8
        %s535 = scalar_lea.vmem %s1, %s534
        %p536 = pneg %p78
        %p537 = pneg %p75
        %p538 = scmp.lt.s32.totalorder %s31, 1
        %s539 = scalar_select %p538, %s31, 1
        %s540 = smul.addr %s539, 4
        %s541 = smul.addr %s540, 8
        %s542 = scalar_lea.vmem %s2, %s541
        %p543 = pneg %p104
        %p544 = pneg %p101
        %p545 = scmp.lt.s32.totalorder %s31, 1
        %s546 = scalar_select %p545, %s31, 1
        %s547 = smul.addr %s546, 4
        %s548 = smul.addr %s547, 8
        %s549 = scalar_lea.vmem %s3, %s548
        %p550 = pneg %p130
        %p551 = pneg %p127
        %p552 = pneg %p151
        %p553 = pneg %p148
        %p554 = pneg %p172
        %p555 = pneg %p169
        %p556 = pneg %p193
        %p557 = pneg %p190
        %p558 = pneg %p214
        %p559 = pneg %p211
        %p560 = pneg %p235
        %p561 = pneg %p232
        %p562 = pneg %p256
        %p563 = pneg %p253
        %p564 = pneg %p277
        %p565 = pneg %p274
        %p566 = pneg %p298
        %p567 = pneg %p295
        %p568 = pneg %p319
        %p569 = pneg %p316
        %p570 = pneg %p340
        %p571 = pneg %p337
        %p572 = pneg %p361
        %p573 = pneg %p358
        %p574 = pneg %p382
        %p575 = pneg %p379
        %p576 = pneg %p403
        %p577 = pneg %p400
        %p578 = pneg %p429
        %p579 = pneg %p426
        %s580 = sand.u32 %s416, 1
        %s581 = scalar_lea.sflag [#allocation3], %s580
        %s582 = sand.u32 %s416, 1
        %s583 = smul.addr %s582, 8
        %s584 = scalar_lea.vmem [#allocation2], %s583
        %p585 = scmp.lt.s32.totalorder %s31, 1
        %s586 = scalar_select %p585, %s31, 1
        %s587 = smul.addr %s586, 8
        %s588 = scalar_lea.vmem %s0, %s587
        %p589 = scmp.lt.s32.totalorder %s31, 1
        %s590 = scalar_select %p589, %s31, 1
        %s591 = smul.addr %s590, 4
        %s592 = smul.addr %s591, 8
        %s593 = scalar_lea.vmem %s1, %s592
        %p594 = scmp.lt.s32.totalorder %s31, 1
        %s595 = scalar_select %p594, %s31, 1
        %s596 = smul.addr %s595, 4
        %s597 = smul.addr %s596, 8
        %s598 = scalar_lea.vmem %s2, %s597
        %p599 = scmp.lt.s32.totalorder %s31, 1
        %s600 = scalar_select %p599, %s31, 1
        %s601 = smul.addr %s600, 4
        %s602 = smul.addr %s601, 8
        %s603 = scalar_lea.vmem %s3, %s602
        %v604 = vld [vmem:[%s588] sm:$0xff]
        %v605 = vld [vmem:[%s593] sm:$0xff]
        %v606 = vld [vmem:[%s593 + $0x8] sm:$0xff]
        %v607 = vld [vmem:[%s593 + $0x10] sm:$0xff]
        %v608 = vld [vmem:[%s593 + $0x18] sm:$0xff]
        %v609 = vld [vmem:[%s6] sm:$0xff]
        %v610 = vld [vmem:[%s4] sm:$0xff]
        %v611 = vld [vmem:[%s4 + $0x8] sm:$0xff]
        %v612 = vld [vmem:[%s4 + $0x10] sm:$0xff]
        %v613 = vld [vmem:[%s4 + $0x18] sm:$0xff]
        %v614 = vld [vmem:[%s5] sm:$0x1]
        %v616 = vperm.slane %v614, 0
        %vm618 = vcmask 261120
        %v620 = vsel %vm618, %v604, 0
        %622 = vmatpush.msra.mxu0 0.0
        %623 = vmatpush.msra.mxu0 0.0
        %624 = vmatpush.msra.mxu0 0.0
        %625 = vmatpush.msra.mxu0 0.0
        %626 = vmatpush.msra.mxu0 0.0
        %627 = vmatpush.msra.mxu0 0.0
        %628 = vmatpush.msra.mxu0 0.0
        %629 = vmatpush.msra.mxu0 0.0
        %630 = vmatpush.msra.mxu0 0.0
        %631 = vmatpush.msra.mxu0 0.0
        %632 = vmatpush.msra.mxu0 0.0
        %633 = vmatpush.msra.mxu0 0.0
        %634 = vmatpush.msra.mxu0 %v613
        %635 = vmatpush.msra.mxu0 %v612
        %636 = vmatpush.msra.mxu0 %v611
        %637 = vmatpush.msra.mxu0 %v610
        %638 = vmatmul.f32.gmra.mxu0 %v620
        %v639 = vpop.f32.mrf.mxu0
        %v640 = vadd.f32 %v616, %v639
        %641 = vdwg.mxu0
        %643 = vrot.lane.b32.xlu0 %v640, 104
        %v644 = vpop.permute.xlu0 %643
        %646 = vrot.lane.b32.xlu0 %v640, 80
        %v647 = vpop.permute.xlu0 %646
        %649 = vrot.lane.b32.xlu0 %v640, 56
        %v650 = vpop.permute.xlu0 %649
        %653 = vset.pattern.permute.xlu0 0
        %654 = vperm.xlu0 %653, %v605
        %v655 = vpop.permute.xlu0 %654
        %658 = vset.pattern.permute.xlu0 0
        %659 = vperm.xlu0 %658, %v606
        %v660 = vpop.permute.xlu0 %659
        %663 = vset.pattern.permute.xlu0 0
        %664 = vperm.xlu0 %663, %v607
        %v665 = vpop.permute.xlu0 %664
        %668 = vset.pattern.permute.xlu0 0
        %669 = vperm.xlu0 %668, %v608
        %v670 = vpop.permute.xlu0 %669
        %v672 = vmul.f32 %v640, %v655
        %v673 = vmul.f32 %v644, %v660
        %v674 = vmul.f32 %v647, %v665
        %v675 = vmul.f32 %v650, %v670
        %v676 = vld [vmem:[%s598] sm:$0xff]
        %v677 = vld [vmem:[%s598 + $0x8] sm:$0xff]
        %v678 = vld [vmem:[%s598 + $0x10] sm:$0xff]
        %v679 = vld [vmem:[%s598 + $0x18] sm:$0xff]
        %680 = vrot.lane.b32.xlu0 %v640, 120
        %v681 = vpop.permute.xlu0 %680
        %682 = vrot.lane.b32.xlu0 %v644, 120
        %v683 = vpop.permute.xlu0 %682
        %684 = vrot.lane.b32.xlu0 %v647, 120
        %v685 = vpop.permute.xlu0 %684
        %686 = vrot.lane.b32.xlu0 %v650, 120
        %v687 = vpop.permute.xlu0 %686
        %vm688 = vcmask 64512
        %v689 = vsel %vm688, %v681, 0
        %v691 = vsel %vm688, %v683, 0
        %v693 = vsel %vm688, %v685, 0
        %v695 = vsel %vm688, %v687, 0
        %697 = vmatpush.msra.mxu0 0.0
        %698 = vmatpush.msra.mxu0 0.0
        %699 = vmatpush.msra.mxu0 0.0
        %700 = vmatpush.msra.mxu0 0.0
        %701 = vmatpush.msra.mxu0 0.0
        %702 = vmatpush.msra.mxu0 0.0
        %703 = vmatpush.msra.mxu0 0.0
        %704 = vmatpush.msra.mxu0 0.0
        %705 = vmatpush.msra.mxu0 0.0
        %706 = vmatpush.msra.mxu0 0.0
        %707 = vmatpush.msra.mxu0 0.0
        %708 = vmatpush.msra.mxu0 0.0
        %709 = vmatpush.msra.mxu0 0.0
        %710 = vmatpush.msra.mxu0 0.0
        %711 = vmatpush.msra.mxu0 0.0
        %712 = vmatpush.msra.mxu0 %v609
        %713 = vmatmul.f32.gmra.mxu0 %v689
        %v714 = vpop.f32.mrf.mxu0
        %v715 = vadd.f32 %v676, %v714
        %716 = vmatmul.f32.gmra.mxu0 %v691
        %v717 = vpop.f32.mrf.mxu0
        %v718 = vadd.f32 %v677, %v717
        %719 = vmatmul.f32.gmra.mxu0 %v693
        %v720 = vpop.f32.mrf.mxu0
        %v721 = vadd.f32 %v678, %v720
        %722 = vmatmul.f32.gmra.mxu0 %v695
        %v723 = vpop.f32.mrf.mxu0
        %v724 = vadd.f32 %v679, %v723
        %725 = vdwg.mxu0
        %vm726 = vcmask 130048
        %v727 = vsel %vm726, %v715, -inf
        %728 = vmax.xlane.f32.xlu0 %v727
        %v729 = vpop.xlane.xlu0 %728
        %v730 = vsel %vm726, %v718, -inf
        %731 = vmax.xlane.f32.xlu0 %v730
        %v732 = vpop.xlane.xlu0 %731
        %v733 = vsel %vm726, %v721, -inf
        %734 = vmax.xlane.f32.xlu0 %v733
        %v735 = vpop.xlane.xlu0 %734
        %v736 = vsel %vm726, %v724, -inf
        %737 = vmax.xlane.f32.xlu0 %v736
        %v738 = vpop.xlane.xlu0 %737
        %vm739 = vcmp.ge.f32.partialorder %v715, %v729
        %vm740 = vcmp.ge.f32.partialorder %v718, %v732
        %vm741 = vcmp.ge.f32.partialorder %v721, %v735
        %vm742 = vcmp.ge.f32.partialorder %v724, %v738
        %v743 = vsel %vm739, 1, 0
        %v744 = vsel %vm740, 1, 0
        %v745 = vsel %vm741, 1, 0
        %v746 = vsel %vm742, 1, 0
        %v747 = vcvt.s32.f32 %v743
        %v748 = vcvt.s32.f32 %v744
        %v749 = vcvt.s32.f32 %v745
        %v750 = vcvt.s32.f32 %v746
        %v752 = vsel %vm726, %v747, 0
        %v755 = vsel %vm726, %v748, 0
        %v758 = vsel %vm726, %v749, 0
        %v761 = vsel %vm726, %v750, 0
        %v764 = vsel %vm726, %v609, 0
        %766 = vmatpush.xpose.msra.mxu0 0.0
        %767 = vmatpush.xpose.msra.mxu0 0.0
        %768 = vmatpush.xpose.msra.mxu0 0.0
        %769 = vmatpush.xpose.msra.mxu0 0.0
        %770 = vmatpush.xpose.msra.mxu0 0.0
        %771 = vmatpush.xpose.msra.mxu0 0.0
        %772 = vmatpush.xpose.msra.mxu0 0.0
        %773 = vmatpush.xpose.msra.mxu0 0.0
        %774 = vmatpush.xpose.msra.mxu0 0.0
        %775 = vmatpush.xpose.msra.mxu0 0.0
        %776 = vmatpush.xpose.msra.mxu0 0.0
        %777 = vmatpush.xpose.msra.mxu0 0.0
        %778 = vmatpush.xpose.msra.mxu0 0.0
        %779 = vmatpush.xpose.msra.mxu0 0.0
        %780 = vmatpush.xpose.msra.mxu0 0.0
        %781 = vmatpush.xpose.msra.mxu0 %v764
        %782 = vmatmul.f32.gmra.mxu0 %v752
        %v783 = vpop.f32.mrf.mxu0
        %v784 = vadd.f32 0.0, %v783
        %785 = vmatmul.f32.gmra.mxu0 %v755
        %v786 = vpop.f32.mrf.mxu0
        %v787 = vadd.f32 0.0, %v786
        %788 = vmatmul.f32.gmra.mxu0 %v758
        %v789 = vpop.f32.mrf.mxu0
        %v790 = vadd.f32 0.0, %v789
        %791 = vmatmul.f32.gmra.mxu0 %v761
        %v792 = vpop.f32.mrf.mxu0
        %v793 = vadd.f32 0.0, %v792
        %794 = vdwg.mxu0
        %v795 = vld [vmem:[%s603] sm:$0xff]
        %v796 = vld [vmem:[%s603 + $0x8] sm:$0xff]
        %v797 = vld [vmem:[%s603 + $0x10] sm:$0xff]
        %v798 = vld [vmem:[%s603 + $0x18] sm:$0xff]
        %v799 = vsel %vm688, %v640, 0
        %v801 = vsel %vm688, %v644, 0
        %v803 = vsel %vm688, %v647, 0
        %v805 = vsel %vm688, %v650, 0
        %v808 = vsel %vm688, %v784, 0
        %v811 = vsel %vm688, %v787, 0
        %v814 = vsel %vm688, %v790, 0
        %v817 = vsel %vm688, %v793, 0
        %819 = vmatpush.xpose.msra.mxu0 0.0
        %820 = vmatpush.xpose.msra.mxu0 0.0
        %821 = vmatpush.xpose.msra.mxu0 0.0
        %822 = vmatpush.xpose.msra.mxu0 0.0
        %823 = vmatpush.xpose.msra.mxu0 0.0
        %824 = vmatpush.xpose.msra.mxu0 0.0
        %825 = vmatpush.xpose.msra.mxu0 0.0
        %826 = vmatpush.xpose.msra.mxu0 0.0
        %827 = vmatpush.xpose.msra.mxu0 0.0
        %828 = vmatpush.xpose.msra.mxu0 0.0
        %829 = vmatpush.xpose.msra.mxu0 0.0
        %830 = vmatpush.xpose.msra.mxu0 0.0
        %831 = vmatpush.xpose.msra.mxu0 %v817
        %832 = vmatpush.xpose.msra.mxu0 %v814
        %833 = vmatpush.xpose.msra.mxu0 %v811
        %834 = vmatpush.xpose.msra.mxu0 %v808
        %835 = vmatmul.f32.gmra.mxu0 %v799
        %v836 = vpop.f32.mrf.mxu0
        %v837 = vadd.f32 %v795, %v836
        %838 = vmatmul.f32.gmra.mxu0 %v801
        %v839 = vpop.f32.mrf.mxu0
        %v840 = vadd.f32 %v796, %v839
        %841 = vmatmul.f32.gmra.mxu0 %v803
        %v842 = vpop.f32.mrf.mxu0
        %v843 = vadd.f32 %v797, %v842
        %844 = vmatmul.f32.gmra.mxu0 %v805
        %v845 = vpop.f32.mrf.mxu0
        %v846 = vadd.f32 %v798, %v845
        %847 = vdwg.mxu0
        %v848 = vrcp.pop 0.5
        %v849 = vmul.f32 0.5, %v848
        %v850 = vsub.f32 1.0, %v849
        %v851 = vmul.f32 %v848, %v850
        %v852 = vadd.f32 %v848, %v851
        %vm853 = vweird.f32 %v848
        %v854 = vsel %vm853, %v848, %v852
        %v855 = vmul.f32 %v837, %v854
        %v856 = vmul.f32 %v840, %v854
        %v857 = vmul.f32 %v843, %v854
        %v858 = vmul.f32 %v846, %v854
        %v859 = vsel %vm618, %v855, -inf
        %860 = vmax.xlane.f32.xlu0 %v859
        %v861 = vpop.xlane.xlu0 %860
        %v862 = vsel %vm618, %v856, -inf
        %863 = vmax.xlane.f32.xlu0 %v862
        %v864 = vpop.xlane.xlu0 %863
        %v865 = vsel %vm618, %v857, -inf
        %866 = vmax.xlane.f32.xlu0 %v865
        %v867 = vpop.xlane.xlu0 %866
        %v868 = vsel %vm618, %v858, -inf
        %869 = vmax.xlane.f32.xlu0 %v868
        %v870 = vpop.xlane.xlu0 %869
        %vm871 = vcmp.ge.f32.partialorder %v855, %v861
        %vm872 = vcmp.ge.f32.partialorder %v856, %v864
        %vm873 = vcmp.ge.f32.partialorder %v857, %v867
        %vm874 = vcmp.ge.f32.partialorder %v858, %v870
        %v875 = vsel %vm871, 1, 0
        %v876 = vsel %vm872, 1, 0
        %v877 = vsel %vm873, 1, 0
        %v878 = vsel %vm874, 1, 0
        %v879 = vcvt.s32.f32 %v875
        %v880 = vcvt.s32.f32 %v876
        %v881 = vcvt.s32.f32 %v877
        %v882 = vcvt.s32.f32 %v878
        %887 = vrot.lane.b32.xlu0 %v672, 112
        %v888 = vpop.permute.xlu0 %887
        %889 = vrot.lane.b32.xlu0 %v673, 112
        %v890 = vpop.permute.xlu0 %889
        %891 = vrot.lane.b32.xlu0 %v674, 112
        %v892 = vpop.permute.xlu0 %891
        %893 = vrot.lane.b32.xlu0 %v675, 112
        %v894 = vpop.permute.xlu0 %893
        %v900 = vsel %vm618, %v879, 0
        %v903 = vsel %vm618, %v880, 0
        %v906 = vsel %vm618, %v881, 0
        %v909 = vsel %vm618, %v882, 0
        %911 = vmatpush.msra.mxu0 0.0
        %912 = vmatpush.msra.mxu0 0.0
        %913 = vmatpush.msra.mxu0 0.0
        %914 = vmatpush.msra.mxu0 0.0
        %915 = vmatpush.msra.mxu0 0.0
        %916 = vmatpush.msra.mxu0 0.0
        %917 = vmatpush.msra.mxu0 0.0
        %918 = vmatpush.msra.mxu0 0.0
        %919 = vmatpush.msra.mxu0 0.0
        %920 = vmatpush.msra.mxu0 0.0
        %921 = vmatpush.msra.mxu0 0.0
        %922 = vmatpush.msra.mxu0 0.0
        %923 = vmatpush.msra.mxu0 %v894
        %924 = vmatpush.msra.mxu0 %v892
        %925 = vmatpush.msra.mxu0 %v890
        %926 = vmatpush.msra.mxu0 %v888
        %927 = vmatmul.f32.gmra.mxu0 %v900
        %v928 = vpop.f32.mrf.mxu0
        %v929 = vadd.f32 0.0, %v928
        %930 = vmatmul.f32.gmra.mxu0 %v903
        %v931 = vpop.f32.mrf.mxu0
        %v932 = vadd.f32 0.0, %v931
        %933 = vmatmul.f32.gmra.mxu0 %v906
        %v934 = vpop.f32.mrf.mxu0
        %v935 = vadd.f32 0.0, %v934
        %936 = vmatmul.f32.gmra.mxu0 %v909
        %v937 = vpop.f32.mrf.mxu0
        %v938 = vadd.f32 0.0, %v937
        %939 = vdwg.mxu0
        %v940 = vmul.f32 %v929, %v655
        %v941 = vmul.f32 %v932, %v660
        %v942 = vmul.f32 %v935, %v665
        %v943 = vmul.f32 %v938, %v670
        %v944 = vld [vmem:[%s7] sm:$0xff]
        %v945 = vld [vmem:[%s7 + $0x8] sm:$0xff]
        %v946 = vld [vmem:[%s7 + $0x10] sm:$0xff]
        %v947 = vld [vmem:[%s7 + $0x18] sm:$0xff]
        %v949 = vsel %vm688, %v941, 0
        %951 = vmatpush.msra.mxu0 0.0
        %952 = vmatpush.msra.mxu0 0.0
        %953 = vmatpush.msra.mxu0 0.0
        %954 = vmatpush.msra.mxu0 0.0
        %955 = vmatpush.msra.mxu0 0.0
        %956 = vmatpush.msra.mxu0 0.0
        %957 = vmatpush.msra.mxu0 0.0
        %958 = vmatpush.msra.mxu0 0.0
        %959 = vmatpush.msra.mxu0 0.0
        %960 = vmatpush.msra.mxu0 0.0
        %961 = vmatpush.msra.mxu0 0.0
        %962 = vmatpush.msra.mxu0 0.0
        %963 = vmatpush.msra.mxu0 0.0
        %964 = vmatpush.msra.mxu0 0.0
        %965 = vmatpush.msra.mxu0 0.0
        %966 = vmatpush.msra.mxu0 %v945
        %967 = vmatmul.f32.gmra.mxu0 %v949
        %v968 = vpop.f32.mrf.mxu0
        %v969 = vadd.f32 0.0, %v968
        %970 = vdwg.mxu0
        %v972 = vsel %vm688, %v940, 0
        %974 = vmatpush.msra.mxu0 0.0
        %975 = vmatpush.msra.mxu0 0.0
        %976 = vmatpush.msra.mxu0 0.0
        %977 = vmatpush.msra.mxu0 0.0
        %978 = vmatpush.msra.mxu0 0.0
        %979 = vmatpush.msra.mxu0 0.0
        %980 = vmatpush.msra.mxu0 0.0
        %981 = vmatpush.msra.mxu0 0.0
        %982 = vmatpush.msra.mxu0 0.0
        %983 = vmatpush.msra.mxu0 0.0
        %984 = vmatpush.msra.mxu0 0.0
        %985 = vmatpush.msra.mxu0 0.0
        %986 = vmatpush.msra.mxu0 0.0
        %987 = vmatpush.msra.mxu0 0.0
        %988 = vmatpush.msra.mxu0 0.0
        %989 = vmatpush.msra.mxu0 %v944
        %990 = vmatmul.f32.gmra.mxu0 %v972
        %v991 = vpop.f32.mrf.mxu0
        %v992 = vadd.f32 %v969, %v991
        %993 = vdwg.mxu0
        %v995 = vsel %vm688, %v942, 0
        %997 = vmatpush.msra.mxu0 0.0
        %998 = vmatpush.msra.mxu0 0.0
        %999 = vmatpush.msra.mxu0 0.0
        %1000 = vmatpush.msra.mxu0 0.0
        %1001 = vmatpush.msra.mxu0 0.0
        %1002 = vmatpush.msra.mxu0 0.0
        %1003 = vmatpush.msra.mxu0 0.0
        %1004 = vmatpush.msra.mxu0 0.0
        %1005 = vmatpush.msra.mxu0 0.0
        %1006 = vmatpush.msra.mxu0 0.0
        %1007 = vmatpush.msra.mxu0 0.0
        %1008 = vmatpush.msra.mxu0 0.0
        %1009 = vmatpush.msra.mxu0 0.0
        %1010 = vmatpush.msra.mxu0 0.0
        %1011 = vmatpush.msra.mxu0 0.0
        %1012 = vmatpush.msra.mxu0 %v946
        %1013 = vmatmul.f32.gmra.mxu0 %v995
        %v1014 = vpop.f32.mrf.mxu0
        %v1015 = vadd.f32 0.0, %v1014
        %1016 = vdwg.mxu0
        %v1017 = vadd.f32 %v992, %v1015
        %v1019 = vsel %vm688, %v943, 0
        %1021 = vmatpush.msra.mxu0 0.0
        %1022 = vmatpush.msra.mxu0 0.0
        %1023 = vmatpush.msra.mxu0 0.0
        %1024 = vmatpush.msra.mxu0 0.0
        %1025 = vmatpush.msra.mxu0 0.0
        %1026 = vmatpush.msra.mxu0 0.0
        %1027 = vmatpush.msra.mxu0 0.0
        %1028 = vmatpush.msra.mxu0 0.0
        %1029 = vmatpush.msra.mxu0 0.0
        %1030 = vmatpush.msra.mxu0 0.0
        %1031 = vmatpush.msra.mxu0 0.0
        %1032 = vmatpush.msra.mxu0 0.0
        %1033 = vmatpush.msra.mxu0 0.0
        %1034 = vmatpush.msra.mxu0 0.0
        %1035 = vmatpush.msra.mxu0 0.0
        %1036 = vmatpush.msra.mxu0 %v947
        %1037 = vmatmul.f32.gmra.mxu0 %v1019
        %v1038 = vpop.f32.mrf.mxu0
        %v1039 = vadd.f32 0.0, %v1038
        %1040 = vdwg.mxu0
        %v1041 = vadd.f32 %v1017, %v1039
        %v1042 = vld [vmem:[%s8] sm:$0x1]
        %v1044 = vperm.slane %v1042, 0
        %v1046 = vadd.f32 %v1041, %v1044
        %v1047 = vadd.f32 %v1046, %v604
        %v1048 = vld [vmem:[%s9] sm:$0x1]
        %v1049 = vld [vmem:[%s10] sm:$0x1]
        %v1050 = vsel %vm618, %v1047, 0.0
        %1051 = vadd.xlane.f32.xlu0 %v1050
        %v1052 = vpop.xlane.xlu0 %1051
        %v1053 = vrcp.pop 32.0
        %v1054 = vmul.f32 32.0, %v1053
        %v1055 = vsub.f32 1.0, %v1054
        %v1056 = vmul.f32 %v1053, %v1055
        %v1057 = vadd.f32 %v1053, %v1056
        %vm1058 = vweird.f32 %v1053
        %v1059 = vsel %vm1058, %v1053, %v1057
        %v1060 = vmul.f32 %v1052, %v1059
        %v1061 = vsub.f32 %v1047, %v1060
        %v1062 = vmul.f32 %v1061, %v1061
        %v1063 = vsel %vm618, %v1062, 0.0
        %1064 = vadd.xlane.f32.xlu0 %v1063
        %v1065 = vpop.xlane.xlu0 %1064
        %v1066 = vmul.f32 %v1065, %v1059
        %v1067 = vadd.f32 %v1066, 1e-05
        %v1068 = vrsqrt.pop %v1067
        %v1069 = vmul.f32 %v1068, %v1067
        %v1070 = vmul.f32 %v1069, %v1068
        %v1071 = vmul.f32 0.5, %v1070
        %v1072 = vsub.f32 1.5, %v1071
        %v1073 = vmul.f32 %v1068, %v1072
        %vm1074 = vweird.f32 %v1067
        %vm1075 = vweird.f32 %v1068
        %vm1076 = vmor %vm1074, %vm1075
        %v1077 = vsel %vm1076, %v1068, %v1073
        %v1078 = vmul.f32 %v1061, %v1077
        %v1080 = vperm.slane %v1048, 0
        %v1082 = vmul.f32 %v1078, %v1080
        %v1084 = vperm.slane %v1049, 0
        %v1086 = vadd.f32 %v1082, %v1084
        %v1087 = vld [vmem:[%s11] sm:$0xff]
        %v1088 = vld [vmem:[%s11 + $0x8] sm:$0xff]
        %v1089 = vld [vmem:[%s11 + $0x10] sm:$0xff]
        %v1090 = vld [vmem:[%s11 + $0x18] sm:$0xff]
        %v1091 = vld [vmem:[%s12] sm:$0x1]
        %v1093 = vperm.slane %v1091, 0
        %v1096 = vsel %vm618, %v1086, 0
        %1098 = vmatpush.msra.mxu0 0.0
        %1099 = vmatpush.msra.mxu0 0.0
        %1100 = vmatpush.msra.mxu0 0.0
        %1101 = vmatpush.msra.mxu0 0.0
        %1102 = vmatpush.msra.mxu0 0.0
        %1103 = vmatpush.msra.mxu0 0.0
        %1104 = vmatpush.msra.mxu0 0.0
        %1105 = vmatpush.msra.mxu0 0.0
        %1106 = vmatpush.msra.mxu0 0.0
        %1107 = vmatpush.msra.mxu0 0.0
        %1108 = vmatpush.msra.mxu0 0.0
        %1109 = vmatpush.msra.mxu0 0.0
        %1110 = vmatpush.msra.mxu0 %v1090
        %1111 = vmatpush.msra.mxu0 %v1089
        %1112 = vmatpush.msra.mxu0 %v1088
        %1113 = vmatpush.msra.mxu0 %v1087
        %1114 = vmatmul.f32.gmra.mxu0 %v1096
        %v1115 = vpop.f32.mrf.mxu0
        %v1116 = vadd.f32 %v1093, %v1115
        %1117 = vdwg.mxu0
        %v1118 = vmul.f32 %v1116, 0.5
        %v1119 = vmul.f32 %v1116, 0.70710677
        %v1120 = vand.u32 2147483647, %v1119
        %v1121 = vmul.f32 %v1120, 0.3275911
        %v1122 = vadd.f32 %v1121, 1.0
        %v1123 = vrcp.pop %v1122
        %v1124 = vmul.f32 %v1122, %v1123
        %v1125 = vsub.f32 1.0, %v1124
        %v1126 = vmul.f32 %v1123, %v1125
        %v1127 = vadd.f32 %v1123, %v1126
        %vm1128 = vweird.f32 %v1122
        %vm1129 = vweird.f32 %v1123
        %vm1130 = vmor %vm1128, %vm1129
        %v1131 = vsel %vm1130, %v1123, %v1127
        %v1132 = vand.u32 2147483647, %v1122
        %vm1133 = vcmp.eq.f32.partialorder %v1132, 8.507059e+37
        %v1134 = vand.u32 %v1122, 2147483648
        %v1135 = vor.u32 1.1754944e-38, %v1134
        %v1136 = vsel %vm1133, %v1135, %v1131
        %v1137 = vmul.f32 1.0, %v1136
        %v1138 = vmul.f32 %v1137, 1.0614054
        %v1139 = vadd.f32 %v1138, -1.4531521
        %v1140 = vmul.f32 %v1139, %v1137
        %v1141 = vadd.f32 %v1140, 1.4214138
        %v1142 = vmul.f32 %v1141, %v1137
        %v1143 = vadd.f32 %v1142, -0.28449672
        %v1144 = vmul.f32 %v1143, %v1137
        %v1145 = vadd.f32 %v1144, 0.2548296
        %v1146 = vmul.f32 %v1145, %v1137
        %v1147 = vsub.f32 0.0, %v1120
        %v1148 = vmul.f32 %v1147, %v1120
        %v1149 = vmul.f32 %v1148, 1.442695
        %v1150 = vpow.pop %v1149
        %v1151 = vmul.f32 %v1146, %v1150
        %v1152 = vsub.f32 1.0, %v1151
        %vm1153 = vcmp.ge.f32.partialorder %v1119, 0.0
        %v1154 = vsub.f32 0.0, %v1152
        %v1155 = vsel %vm1153, %v1152, %v1154
        %v1156 = vadd.f32 %v1155, 1.0
        %v1157 = vmul.f32 %v1118, %v1156
        %v1158 = vld [vmem:[%s13] sm:$0xff]
        %v1159 = vld [vmem:[%s13 + $0x8] sm:$0xff]
        %v1160 = vld [vmem:[%s13 + $0x10] sm:$0xff]
        %v1161 = vld [vmem:[%s13 + $0x18] sm:$0xff]
        %v1162 = vld [vmem:[%s13 + $0x20] sm:$0xff]
        %v1163 = vld [vmem:[%s13 + $0x28] sm:$0xff]
        %v1164 = vld [vmem:[%s13 + $0x30] sm:$0xff]
        %v1165 = vld [vmem:[%s13 + $0x38] sm:$0xff]
        %v1166 = vld [vmem:[%s14] sm:$0x1]
        %v1168 = vperm.slane %v1166, 0
        %vm1170 = vcmask 523264
        %v1172 = vsel %vm1170, %v1157, 0
        %1174 = vmatpush.msra.mxu0 0.0
        %1175 = vmatpush.msra.mxu0 0.0
        %1176 = vmatpush.msra.mxu0 0.0
        %1177 = vmatpush.msra.mxu0 0.0
        %1178 = vmatpush.msra.mxu0 0.0
        %1179 = vmatpush.msra.mxu0 0.0
        %1180 = vmatpush.msra.mxu0 0.0
        %1181 = vmatpush.msra.mxu0 0.0
        %1182 = vmatpush.msra.mxu0 %v1165
        %1183 = vmatpush.msra.mxu0 %v1164
        %1184 = vmatpush.msra.mxu0 %v1163
        %1185 = vmatpush.msra.mxu0 %v1162
        %1186 = vmatpush.msra.mxu0 %v1161
        %1187 = vmatpush.msra.mxu0 %v1160
        %1188 = vmatpush.msra.mxu0 %v1159
        %1189 = vmatpush.msra.mxu0 %v1158
        %1190 = vmatmul.f32.gmra.mxu0 %v1172
        %v1191 = vpop.f32.mrf.mxu0
        %v1192 = vadd.f32 %v1168, %v1191
        %1193 = vdwg.mxu0
        %v1194 = vadd.f32 %v1192, %v1086
        %v1195 = vld [vmem:[%s15] sm:$0x1]
        %v1196 = vld [vmem:[%s16] sm:$0x1]
        %v1197 = vsel %vm618, %v1194, 0.0
        %1198 = vadd.xlane.f32.xlu0 %v1197
        %v1199 = vpop.xlane.xlu0 %1198
        %v1200 = vmul.f32 %v1199, %v1059
        %v1201 = vsub.f32 %v1194, %v1200
        %v1202 = vmul.f32 %v1201, %v1201
        %v1203 = vsel %vm618, %v1202, 0.0
        %1204 = vadd.xlane.f32.xlu0 %v1203
        %v1205 = vpop.xlane.xlu0 %1204
        %v1206 = vmul.f32 %v1205, %v1059
        %v1207 = vadd.f32 %v1206, 1e-05
        %v1208 = vrsqrt.pop %v1207
        %v1209 = vmul.f32 %v1208, %v1207
        %v1210 = vmul.f32 %v1209, %v1208
        %v1211 = vmul.f32 0.5, %v1210
        %v1212 = vsub.f32 1.5, %v1211
        %v1213 = vmul.f32 %v1208, %v1212
        %vm1214 = vweird.f32 %v1207
        %vm1215 = vweird.f32 %v1208
        %vm1216 = vmor %vm1214, %vm1215
        %v1217 = vsel %vm1216, %v1208, %v1213
        %v1218 = vmul.f32 %v1201, %v1217
        %v1220 = vperm.slane %v1195, 0
        %v1222 = vmul.f32 %v1218, %v1220
        %v1224 = vperm.slane %v1196, 0
        %v1226 = vadd.f32 %v1222, %v1224
        %1227 = vst.msk [vmem:[%s584] sm:$0xff] %vm618, %v1226
        %s1228 = sand.u32 %s416, 1
        %s1229 = scalar_lea.sflag [#allocation3], %s1228
        %s1230 = sand.u32 %s416, 1
        %s1231 = smul.addr %s1230, 8
        %s1232 = scalar_lea.vmem [#allocation2], %s1231
        // Predicated region
        $region89: #{tpu_custom_call.1} parent=87 // pred_check
          %p1233 = pneg %p426
        $region90: #{tpu_custom_call.1} parent=87 // pred_check_branch
          %1235 = sbr.rel (%p1233) target = $region92
        $region91: #{tpu_custom_call.1} parent=87 // pred_region
          %1237 = vsyncadd %s1229, 0
          %s1238 = smul.addr %s31, 8
          %s1239 = scalar_lea.hbm %s17, %s1238
          %s1241 = sshll.u32 %s1232, 4
          %s1242 = int_to_ptr.vmem [resolvable:$true] %s1241
          %s1243 = sshll.u32 %s1239, 4
          %s1244 = int_to_ptr.hbm [resolvable:$true] %s1243
          %1246 = dma.vmem_to_hbm [thread:$0]  %s1242, 128, %s1244, %s1229
        $region92: #{tpu_custom_call.1} parent=87 // pred_fallthru
          _
      $region88: #{tpu_custom_call.1} parent=5 // pred_fallthru
        _
      %p1247 = scmp.le.s32.totalorder 2, %s26
      // Predicated region
      $region93: #{tpu_custom_call.1} parent=5 // pred_check
        %p1248 = pneg %p1247
      $region94: #{tpu_custom_call.1} parent=5 // pred_check_branch
        %1250 = sbr.rel (%p1248) target = $region96
      $region95: #{tpu_custom_call.1} parent=5 // pred_region
        %s1251 = ssub.s32 %s26, 2
        // Predicated region
        $region97: #{tpu_custom_call.1} parent=95 // pred_check
          %p1252 = pneg %p432
        $region98: #{tpu_custom_call.1} parent=95 // pred_check_branch
          %1254 = sbr.rel (%p1252) target = $region100
        $region99: #{tpu_custom_call.1} parent=95 // pred_region
          %s1255 = sand.u32 %s417, 1
          %s1256 = scalar_lea.sflag [#allocation3], %s1255
          %s1257 = sand.u32 %s417, 1
          %s1258 = smul.addr %s1257, 8
          %s1259 = scalar_lea.vmem [#allocation2], %s1258
          %1261 = dma.done %s1256, 128
        $region100: #{tpu_custom_call.1} parent=95 // pred_fallthru
          _
      $region96: #{tpu_custom_call.1} parent=5 // pred_fallthru
        _
    $region6: #{tpu_custom_call.1} parent=1 // loop_footer
      %s30 = sadd.s32 1, %s26
    $region7: #{tpu_custom_call.1} parent=1 // loop_footer_branch
      %25 = sbr.rel target = $region3
    $region8: #{tpu_custom_call.1} parent=1 // loop_exit
      _
    %1262 = vsyncpa [#allocation3], 1
    %s1263 = scalar_lea.sflag [#allocation3], 1
    %1264 = vsyncpa %s1263, 1

</llo_original>
